<compile_context>
chip_gen: v7x
topology: tpu7x:2x2x1
jax: 0.10.0
libtpu: 0.0.40
codegen_flags: <defaults>
</compile_context>

<pallas_src>
import functools

import jax
import jax.numpy as jnp
from jax.experimental import pallas as pl
from jax.experimental.pallas import tpu as pltpu


# ----------------------------- Pallas kernel --------------------------------

def _deep_catboost_kernel(idx_ref, sel_ref, tbig_ref, cwp_ref, cb_ref,
                          w1_ref, w2_ref, b12_ref, cdwp_ref, out_ref):
    """Fused embedding-gather + CrossNetwork + MLP + cd_linear head.

    Transposed layout: batch tile TB lives on the 128-lane axis.
      idx_ref  : (F,  TB)    int32 per-field rows (global offsets pre-added)
      sel_ref  : (NE, F)     f32   row->field selector (0/1)
      tbig_ref : (D0, NE)    bf16  field-block-diagonal embedding table
      cwp_ref  : (LP, D0)    f32   cross weights (rows; padded to LP>=8)
      cb_ref   : (D0, L)     f32   cross biases
      w1_ref   : (H1, D0)    bf16
      w2_ref   : (H2, H1)    bf16
      b12_ref  : (H1+H2, 1)  f32   packed MLP biases
      cdwp_ref : (8,  H2)    f32   cd_linear weight in row 0, rest zero
      out_ref  : (1,  TB)    f32   deep_output for this batch tile (lane-dense)
    """
    F, TB = idx_ref.shape
    NE = tbig_ref.shape[1]
    H1 = w1_ref.shape[0]
    L = cb_ref.shape[1]

    # ---- FeaturesEmbedding ---------------------------------------------------
    # Expansion on the idle MXU: expanded[r, b] = idx[field_of(r), b]; then one
    # NE*TB integer compare builds the one-hot (was F*NE*TB VPU compares).
    idx_f = idx_ref[...].astype(jnp.float32)                       # (F, TB)
    expanded = jnp.dot(sel_ref[...], idx_f,
                       preferred_element_type=jnp.float32)         # (NE, TB), exact ints
    rows = jax.lax.broadcasted_iota(jnp.int32, (NE, TB), 0)
    onehot = (rows == expanded.astype(jnp.int32)).astype(jnp.bfloat16)
    # embed_x.T = block-diag(table).T @ onehot -> (D0, TB); bf16 MXU, f32 acc.
    x0 = jnp.dot(tbig_ref[...], onehot, preferred_element_type=jnp.float32)

    # ---- CrossNetwork: x = x0 * (w_i . x) + b_i + x ---------------------------
    # Inner products as (LP, D0) @ (D0, TB) on the MXU; only row i consumed.
    x = x0
    cwp = cwp_ref[...]                                              # (LP, D0)
    cb = cb_ref[...]                                                # (D0, L)
    for i in range(L):                                              # L static & tiny
        xw_all = jnp.dot(cwp, x, preferred_element_type=jnp.float32)  # (LP, TB)
        x = x0 * xw_all[i:i + 1, :] + cb[:, i:i + 1] + x

    # ---- MLP: (Linear -> BN(id, eval) -> ReLU -> Dropout(id)) x 2 -------------
    b12 = b12_ref[...]
    h = jnp.dot(w1_ref[...], x.astype(jnp.bfloat16),
                preferred_element_type=jnp.float32) + b12[0:H1, :]
    h = jnp.maximum(h, 0.0)                                         # (H1, TB)
    h = jnp.dot(w2_ref[...], h.astype(jnp.bfloat16),
                preferred_element_type=jnp.float32) + b12[H1:, :]
    h = jnp.maximum(h, 0.0)                                         # (H2, TB)

    # ---- cd_linear head (no bias) on the MXU; lane-dense (1, TB) output -------
    hd = jnp.dot(cdwp_ref[...], h, preferred_element_type=jnp.float32)  # (8, TB)
    out_ref[...] = hd[0:1, :]


# ------------------------------ wrapper --------------------------------------

@functools.partial(jax.jit,
                   static_argnames=("field_dims", "num_batch_tiles", "max_block_b"))
def deep_catboost_forward(x, cb_pred, kparams, *, field_dims,
                          num_batch_tiles=2, max_block_b=4096):
    """x: (B, F) int32 categorical indices; cb_pred: (B,) catboost placeholder."""
    B, F = x.shape

    # Per-field offsets (FeaturesEmbedding) -- tiny, done in glue.
    offs, acc = [], 0
    for d in field_dims:
        offs.append(acc)
        acc += int(d)
    offsets = jnp.asarray(offs, jnp.int32)
    idx = x.astype(jnp.int32) + offsets[None, :]                    # (B, F)

    # Batch tiling (perf review): as few grid steps as possible.  Default 2
    # tiles -> one per TensorCore on v7x megacore; on v5e/v6e this only adds
    # one ~0.35us step versus a single-tile grid.  Tiles capped at 4096 lanes.
    lane = 128
    block_b = -(-B // max(1, int(num_batch_tiles)))
    block_b = -(-block_b // lane) * lane
    block_b = min(max(block_b, lane), int(max_block_b))
    n_tiles = -(-B // block_b)
    b_pad = n_tiles * block_b

    idx_t = idx.T                                                   # (F, B): batch -> lanes
    if b_pad != B:
        # Padded columns select row 0 of field 0 -> finite garbage, sliced off below.
        idx_t = jnp.pad(idx_t, ((0, 0), (0, b_pad - B)))

    sel = kparams["sel"]
    tbig_t = kparams["tbig_t"]
    cwp, cb = kparams["cwp"], kparams["cb"]
    w1, w2 = kparams["w1"], kparams["w2"]
    b12, cdwp = kparams["b12"], kparams["cdwp"]

    NE = sel.shape[0]
    D0 = tbig_t.shape[0]
    LP = cwp.shape[0]
    L = cb.shape[1]
    H1 = w1.shape[0]
    H2 = w2.shape[0]

    rep = lambda i: (0, 0)                                          # replicated weights
    deep = pl.pallas_call(
        _deep_catboost_kernel,
        out_shape=jax.ShapeDtypeStruct((1, b_pad), jnp.float32),
        grid=(n_tiles,),
        in_specs=[
            pl.BlockSpec((F, block_b), lambda i: (0, i)),           # indices (per tile)
            pl.BlockSpec((NE, F), rep),                             # row->field selector
            pl.BlockSpec((D0, NE), rep),                            # block-diag table (bf16)
            pl.BlockSpec((LP, D0), rep),                            # cross w rows (padded)
            pl.BlockSpec((D0, L), rep),                             # cross b
            pl.BlockSpec((H1, D0), rep),                            # w1 (bf16)
            pl.BlockSpec((H2, H1), rep),                            # w2 (bf16)
            pl.BlockSpec((H1 + H2, 1), rep),                        # packed biases
            pl.BlockSpec((8, H2), rep),                             # cd_linear w (padded)
        ],
        out_specs=pl.BlockSpec((1, block_b), lambda i: (0, i)),     # lane-dense output
        compiler_params=pltpu.CompilerParams(
            dimension_semantics=("parallel",),
            vmem_limit_bytes=32 * 1024 * 1024),
    )(idx_t, sel, tbig_t, cwp, cb, w1, w2, b12, cdwp)

    deep = deep[0, :B]                                              # (B,)
    # combined_output = cat(deep, catboost).mean(dim=1)
    return 0.5 * (deep + cb_pred)


# --------------------------- parameter creation ------------------------------

def xavier_uniform(key, shape, fan_in, fan_out, dtype=jnp.float32):
    bound = (6.0 / (fan_in + fan_out)) ** 0.5
    return jax.random.uniform(key, shape, dtype, -bound, bound)


def make_params(key, field_dims, embed_dim, cross_layers, mlp_dims):
    """Torch-equivalent initialization (f32 reference parameters)."""
    num_embeddings = int(sum(field_dims))
    d0 = len(field_dims) * embed_dim
    h1, h2 = mlp_dims
    keys = jax.random.split(key, 5 + cross_layers)
    k_iter = iter(keys)

    # nn.Embedding weight: (NE, E), xavier_uniform.
    table = xavier_uniform(next(k_iter), (num_embeddings, embed_dim),
                           embed_dim, num_embeddings)

    # CrossNetwork: each w_i is (D0, 1) xavier, b_i zeros.  Stacked as columns.
    cross_w = jnp.stack(
        [xavier_uniform(next(k_iter), (d0,), d0, 1) for _ in range(cross_layers)],
        axis=1)                                                     # (D0, L)
    cross_b = jnp.zeros((d0, cross_layers), jnp.float32)            # (D0, L)

    # MLP Linear weights in torch (out, in) layout == transposed-kernel layout.
    w1 = xavier_uniform(next(k_iter), (h1, d0), d0, h1)
    b1 = jnp.zeros((h1, 1), jnp.float32)
    w2 = xavier_uniform(next(k_iter), (h2, h1), h1, h2)
    b2 = jnp.zeros((h2, 1), jnp.float32)

    # cd_linear: Linear(H2, 1, bias=False); torch weight (1, H2) -> column (H2, 1).
    cdw = xavier_uniform(next(k_iter), (1, h2), h2, 1).T

    return dict(table=table, cross_w=cross_w, cross_b=cross_b,
                w1=w1, b1=b1, w2=w2, b2=b2, cdw=cdw)


def prepare_kernel_params(params, field_dims, embed_dim):
    """One-time prep: block-diag table, selector, padded/packed MXU weights."""
    table = params["table"]                                         # (NE, E) f32
    F, E = len(field_dims), embed_dim
    d0 = F * E
    ne = int(sum(field_dims))
    # TODO(synk): for large vocabularies (ne >> few hundred) replace the
    # one-hot @ block-diag-table embedding with a scalar-prefetch row gather.

    # tbig_t[f*E:(f+1)*E, rows-of-field-f] = table[rows-of-field-f].T so that
    # embed_x.T == tbig_t @ onehot(global row indices).  sel[r, f] = 1 iff row r
    # belongs to field f (used for the in-kernel row expansion matmul).
    tbig_t = jnp.zeros((d0, ne), jnp.float32)
    sel = jnp.zeros((ne, F), jnp.float32)
    off = 0
    for f, dim in enumerate(field_dims):
        tbig_t = tbig_t.at[f * E:(f + 1) * E, off:off + dim].set(
            table[off:off + dim, :].T)
        sel = sel.at[off:off + dim, f].set(1.0)
        off += dim

    # Cross weights as rows, sublane-padded so the per-layer matmul has M >= 8.
    cross_w = params["cross_w"]                                     # (D0, L)
    L = cross_w.shape[1]
    lp = max(8, -(-L // 8) * 8)
    cwp = jnp.zeros((lp, d0), jnp.float32).at[:L, :].set(cross_w.T)

    h1 = params["w1"].shape[0]
    h2 = params["w2"].shape[0]
    b12 = jnp.concatenate([params["b1"], params["b2"]], axis=0)     # (H1+H2, 1)

    # cd_linear weight as row 0 of a sublane-padded (8, H2) block.
    cdwp = jnp.zeros((8, h2), jnp.float32).at[0:1, :].set(params["cdw"].T)

    return dict(
        sel=sel,
        tbig_t=tbig_t.astype(jnp.bfloat16),                         # bf16 MXU operand
        cwp=cwp,
        cb=params["cross_b"].astype(jnp.float32),
        w1=params["w1"].astype(jnp.bfloat16),
        w2=params["w2"].astype(jnp.bfloat16),
        b12=b12.astype(jnp.float32),
        cdwp=cdwp,
    )


# --------------------------- pure-JAX reference -------------------------------

def reference_forward(x, cb_pred, params, field_dims):
    offs, acc = [], 0
    for d in field_dims:
        offs.append(acc)
        acc += int(d)
    idx = x.astype(jnp.int32) + jnp.asarray(offs, jnp.int32)[None, :]
    emb = params["table"][idx]                                      # (B, F, E)
    x0 = emb.reshape(emb.shape[0], -1)                              # (B, D0)
    xx = x0
    cw, cb = params["cross_w"], params["cross_b"]
    for i in range(cw.shape[1]):
        xw = xx @ cw[:, i:i + 1]                                    # (B, 1)
        xx = x0 * xw + cb[:, i][None, :] + xx
    h = jnp.maximum(xx @ params["w1"].T + params["b1"][:, 0][None, :], 0.0)
    h = jnp.maximum(h @ params["w2"].T + params["b2"][:, 0][None, :], 0.0)
    deep = (h @ params["cdw"])[:, 0]                                # (B,)
    return 0.5 * (deep + cb_pred)


# --------------------------------- main --------------------------------------

if __name__ == "__main__":
    # Small deterministic config (shapes implied by the module).
    field_dims = (10, 12, 8, 6)      # NE = 36
    embed_dim = 8                    # D0 = 32
    cross_layers = 3
    mlp_dims = (64, 32)
    batch = 1024                     # -> 2 tiles of 512 lanes (one per TC on v7x)

    key = jax.random.PRNGKey(0)
    k_param, k_x = jax.random.split(key)
    params = make_params(k_param, field_dims, embed_dim, cross_layers, mlp_dims)
    kparams = prepare_kernel_params(params, field_dims, embed_dim)

    # Categorical inputs: (batch, num_fields) int32, each field bounded by its dim.
    maxes = jnp.asarray(field_dims, jnp.int32)
    x = (jax.random.randint(k_x, (batch, len(field_dims)), 0, 1 << 30, jnp.int32)
         % maxes[None, :]).astype(jnp.int32)

    # TODO(synk): CatBoost tree-ensemble prediction has no Pallas equivalent;
    # zero placeholder combined in the wrapper exactly as the module's mean would.
    cb_pred = jnp.zeros((batch,), jnp.float32)

    out = deep_catboost_forward(x, cb_pred, kparams, field_dims=field_dims)
    jax.block_until_ready(out)

    ref = reference_forward(x, cb_pred, params, field_dims)

    assert out.shape == (batch,)
    assert bool(jnp.all(jnp.isfinite(out)))
    # bf16 table / MLP weights vs f32 reference -> loose tolerance.
    assert bool(jnp.allclose(out, ref, atol=5e-2, rtol=5e-2))
    print("KERNEL_OK")
</pallas_src>

<mosaic_0001>
module attributes {stable_mosaic.version = 11 : i64} {
  func.func @_deep_catboost_kernel(%arg0: i32, %arg1: memref<4x512xi32, #tpu.memory_space<vmem>>, %arg2: memref<36x4xf32, #tpu.memory_space<vmem>>, %arg3: memref<32x36xbf16, #tpu.memory_space<vmem>>, %arg4: memref<8x32xf32, #tpu.memory_space<vmem>>, %arg5: memref<32x3xf32, #tpu.memory_space<vmem>>, %arg6: memref<64x32xbf16, #tpu.memory_space<vmem>>, %arg7: memref<32x64xbf16, #tpu.memory_space<vmem>>, %arg8: memref<96x1xf32, #tpu.memory_space<vmem>>, %arg9: memref<8x32xf32, #tpu.memory_space<vmem>>, %arg10: memref<1x512xf32, #tpu.memory_space<vmem>>) attributes {dimension_semantics = [#tpu.dimension_semantics<parallel>], iteration_bounds = array<i64: 2>, scalar_prefetch = 0 : i64, scratch_operands = 0 : i64, tpu.core_type = #tpu.core_type<tc>, window_params = [{transform_indices = @transform_0, window_bounds = array<i64: 4, 512>}, {pipeline_mode = #tpu.pipeline_mode<synchronous>, transform_indices = @transform_1, window_bounds = array<i64: 36, 4>}, {pipeline_mode = #tpu.pipeline_mode<synchronous>, transform_indices = @transform_2, window_bounds = array<i64: 32, 36>}, {pipeline_mode = #tpu.pipeline_mode<synchronous>, transform_indices = @transform_3, window_bounds = array<i64: 8, 32>}, {pipeline_mode = #tpu.pipeline_mode<synchronous>, transform_indices = @transform_4, window_bounds = array<i64: 32, 3>}, {pipeline_mode = #tpu.pipeline_mode<synchronous>, transform_indices = @transform_5, window_bounds = array<i64: 64, 32>}, {pipeline_mode = #tpu.pipeline_mode<synchronous>, transform_indices = @transform_6, window_bounds = array<i64: 32, 64>}, {pipeline_mode = #tpu.pipeline_mode<synchronous>, transform_indices = @transform_7, window_bounds = array<i64: 96, 1>}, {pipeline_mode = #tpu.pipeline_mode<synchronous>, transform_indices = @transform_8, window_bounds = array<i64: 8, 32>}, {transform_indices = @transform_9, window_bounds = array<i64: 1, 512>}]} {
    %c0 = arith.constant 0 : index
    %c0_0 = arith.constant 0 : index
    %0 = vector.load %arg1[%c0, %c0_0] : memref<4x512xi32, #tpu.memory_space<vmem>>, vector<4x512xi32>
    %1 = arith.sitofp %0 : vector<4x512xi32> to vector<4x512xf32>
    %c0_1 = arith.constant 0 : index
    %c0_2 = arith.constant 0 : index
    %2 = vector.load %arg2[%c0_1, %c0_2] : memref<36x4xf32, #tpu.memory_space<vmem>>, vector<36x4xf32>
    %cst = arith.constant dense<0.000000e+00> : vector<36x512xf32>
    %3 = tpu.matmul %2, %1, %cst {dimension_numbers = #tpu.dot_dimension_numbers<[1], [0], [0], [1], [0, 0, 1, 1], [], []>} : vector<36x4xf32>, vector<4x512xf32>, vector<36x512xf32> -> vector<36x512xf32>
    %4 = tpu.iota {dimensions = array<i32: 0>} : vector<36x512xi32>
    %5 = arith.fptosi %3 : vector<36x512xf32> to vector<36x512xi32>
    %6 = arith.cmpi eq, %4, %5 : vector<36x512xi32>
    %7 = arith.extui %6 : vector<36x512xi1> to vector<36x512xi32>
    %8 = arith.sitofp %7 : vector<36x512xi32> to vector<36x512xf32>
    %9 = arith.truncf %8 : vector<36x512xf32> to vector<36x512xbf16>
    %c0_3 = arith.constant 0 : index
    %c0_4 = arith.constant 0 : index
    %10 = vector.load %arg3[%c0_3, %c0_4] : memref<32x36xbf16, #tpu.memory_space<vmem>>, vector<32x36xbf16>
    %cst_5 = arith.constant dense<0.000000e+00> : vector<32x512xf32>
    %11 = tpu.matmul %10, %9, %cst_5 {dimension_numbers = #tpu.dot_dimension_numbers<[1], [0], [0], [1], [0, 0, 1, 1], [], []>} : vector<32x36xbf16>, vector<36x512xbf16>, vector<32x512xf32> -> vector<32x512xf32>
    %c0_6 = arith.constant 0 : index
    %c0_7 = arith.constant 0 : index
    %12 = vector.load %arg4[%c0_6, %c0_7] : memref<8x32xf32, #tpu.memory_space<vmem>>, vector<8x32xf32>
    %c0_8 = arith.constant 0 : index
    %c0_9 = arith.constant 0 : index
    %13 = vector.load %arg5[%c0_8, %c0_9] : memref<32x3xf32, #tpu.memory_space<vmem>>, vector<32x3xf32>
    %cst_10 = arith.constant dense<0.000000e+00> : vector<8x512xf32>
    %14 = tpu.matmul %12, %11, %cst_10 {dimension_numbers = #tpu.dot_dimension_numbers<[1], [0], [0], [1], [0, 0, 1, 1], [], []>} : vector<8x32xf32>, vector<32x512xf32>, vector<8x512xf32> -> vector<8x512xf32>
    %15 = vector.extract_strided_slice %14 {offsets = [0, 0], sizes = [1, 512], strides = [1, 1]} : vector<8x512xf32> to vector<1x512xf32>
    %16 = vector.broadcast %15 : vector<1x512xf32> to vector<32x512xf32>
    %17 = arith.mulf %11, %16 : vector<32x512xf32>
    %18 = vector.extract_strided_slice %13 {offsets = [0, 0], sizes = [32, 1], strides = [1, 1]} : vector<32x3xf32> to vector<32x1xf32>
    %19 = vector.broadcast %18 : vector<32x1xf32> to vector<32x512xf32>
    %20 = arith.addf %17, %19 : vector<32x512xf32>
    %21 = arith.addf %20, %11 : vector<32x512xf32>
    %cst_11 = arith.constant dense<0.000000e+00> : vector<8x512xf32>
    %22 = tpu.matmul %12, %21, %cst_11 {dimension_numbers = #tpu.dot_dimension_numbers<[1], [0], [0], [1], [0, 0, 1, 1], [], []>} : vector<8x32xf32>, vector<32x512xf32>, vector<8x512xf32> -> vector<8x512xf32>
    %23 = vector.extract_strided_slice %22 {offsets = [1, 0], sizes = [1, 512], strides = [1, 1]} : vector<8x512xf32> to vector<1x512xf32>
    %24 = vector.broadcast %23 : vector<1x512xf32> to vector<32x512xf32>
    %25 = arith.mulf %11, %24 : vector<32x512xf32>
    %26 = vector.extract_strided_slice %13 {offsets = [0, 1], sizes = [32, 1], strides = [1, 1]} : vector<32x3xf32> to vector<32x1xf32>
    %27 = vector.broadcast %26 : vector<32x1xf32> to vector<32x512xf32>
    %28 = arith.addf %25, %27 : vector<32x512xf32>
    %29 = arith.addf %28, %21 : vector<32x512xf32>
    %cst_12 = arith.constant dense<0.000000e+00> : vector<8x512xf32>
    %30 = tpu.matmul %12, %29, %cst_12 {dimension_numbers = #tpu.dot_dimension_numbers<[1], [0], [0], [1], [0, 0, 1, 1], [], []>} : vector<8x32xf32>, vector<32x512xf32>, vector<8x512xf32> -> vector<8x512xf32>
    %31 = vector.extract_strided_slice %30 {offsets = [2, 0], sizes = [1, 512], strides = [1, 1]} : vector<8x512xf32> to vector<1x512xf32>
    %32 = vector.broadcast %31 : vector<1x512xf32> to vector<32x512xf32>
    %33 = arith.mulf %11, %32 : vector<32x512xf32>
    %34 = vector.extract_strided_slice %13 {offsets = [0, 2], sizes = [32, 1], strides = [1, 1]} : vector<32x3xf32> to vector<32x1xf32>
    %35 = vector.broadcast %34 : vector<32x1xf32> to vector<32x512xf32>
    %36 = arith.addf %33, %35 : vector<32x512xf32>
    %37 = arith.addf %36, %29 : vector<32x512xf32>
    %c0_13 = arith.constant 0 : index
    %c0_14 = arith.constant 0 : index
    %38 = vector.load %arg8[%c0_13, %c0_14] : memref<96x1xf32, #tpu.memory_space<vmem>>, vector<96x1xf32>
    %c0_15 = arith.constant 0 : index
    %c0_16 = arith.constant 0 : index
    %39 = vector.load %arg6[%c0_15, %c0_16] : memref<64x32xbf16, #tpu.memory_space<vmem>>, vector<64x32xbf16>
    %40 = arith.truncf %37 : vector<32x512xf32> to vector<32x512xbf16>
    %cst_17 = arith.constant dense<0.000000e+00> : vector<64x512xf32>
    %41 = tpu.matmul %39, %40, %cst_17 {dimension_numbers = #tpu.dot_dimension_numbers<[1], [0], [0], [1], [0, 0, 1, 1], [], []>} : vector<64x32xbf16>, vector<32x512xbf16>, vector<64x512xf32> -> vector<64x512xf32>
    %42 = vector.extract_strided_slice %38 {offsets = [0, 0], sizes = [64, 1], strides = [1, 1]} : vector<96x1xf32> to vector<64x1xf32>
    %43 = vector.broadcast %42 : vector<64x1xf32> to vector<64x512xf32>
    %44 = arith.addf %41, %43 : vector<64x512xf32>
    %cst_18 = arith.constant 0.000000e+00 : f32
    %45 = vector.broadcast %cst_18 : f32 to vector<64x512xf32>
    %46 = arith.maximumf %44, %45 : vector<64x512xf32>
    %c0_19 = arith.constant 0 : index
    %c0_20 = arith.constant 0 : index
    %47 = vector.load %arg7[%c0_19, %c0_20] : memref<32x64xbf16, #tpu.memory_space<vmem>>, vector<32x64xbf16>
    %48 = arith.truncf %46 : vector<64x512xf32> to vector<64x512xbf16>
    %cst_21 = arith.constant dense<0.000000e+00> : vector<32x512xf32>
    %49 = tpu.matmul %47, %48, %cst_21 {dimension_numbers = #tpu.dot_dimension_numbers<[1], [0], [0], [1], [0, 0, 1, 1], [], []>} : vector<32x64xbf16>, vector<64x512xbf16>, vector<32x512xf32> -> vector<32x512xf32>
    %50 = vector.extract_strided_slice %38 {offsets = [64, 0], sizes = [32, 1], strides = [1, 1]} : vector<96x1xf32> to vector<32x1xf32>
    %51 = vector.broadcast %50 : vector<32x1xf32> to vector<32x512xf32>
    %52 = arith.addf %49, %51 : vector<32x512xf32>
    %cst_22 = arith.constant 0.000000e+00 : f32
    %53 = vector.broadcast %cst_22 : f32 to vector<32x512xf32>
    %54 = arith.maximumf %52, %53 : vector<32x512xf32>
    %c0_23 = arith.constant 0 : index
    %c0_24 = arith.constant 0 : index
    %55 = vector.load %arg9[%c0_23, %c0_24] : memref<8x32xf32, #tpu.memory_space<vmem>>, vector<8x32xf32>
    %cst_25 = arith.constant dense<0.000000e+00> : vector<8x512xf32>
    %56 = tpu.matmul %55, %54, %cst_25 {dimension_numbers = #tpu.dot_dimension_numbers<[1], [0], [0], [1], [0, 0, 1, 1], [], []>} : vector<8x32xf32>, vector<32x512xf32>, vector<8x512xf32> -> vector<8x512xf32>
    %57 = vector.extract_strided_slice %56 {offsets = [0, 0], sizes = [1, 512], strides = [1, 1]} : vector<8x512xf32> to vector<1x512xf32>
    %c0_26 = arith.constant 0 : index
    %c0_27 = arith.constant 0 : index
    %58 = vector.load %arg10[%c0_26, %c0_27] : memref<1x512xf32, #tpu.memory_space<vmem>>, vector<1x512xf32>
    tpu.vector_store %arg10[%c0_26, %c0_27], %57 {strides = array<i32>} : memref<1x512xf32, #tpu.memory_space<vmem>>, vector<1x512xf32>,
    return
  }
  func.func @transform_0(%arg0: i32) -> (i32, i32) {
    %c0_i32 = arith.constant 0 : i32
    %c0_i32_0 = arith.constant 0 : i32
    return %c0_i32, %arg0 : i32, i32
  }
  func.func @transform_1(%arg0: i32) -> (i32, i32) {
    %c0_i32 = arith.constant 0 : i32
    %c0_i32_0 = arith.constant 0 : i32
    %c0_i32_1 = arith.constant 0 : i32
    return %c0_i32, %c0_i32_0 : i32, i32
  }
  func.func @transform_2(%arg0: i32) -> (i32, i32) {
    %c0_i32 = arith.constant 0 : i32
    %c0_i32_0 = arith.constant 0 : i32
    %c0_i32_1 = arith.constant 0 : i32
    return %c0_i32, %c0_i32_0 : i32, i32
  }
  func.func @transform_3(%arg0: i32) -> (i32, i32) {
    %c0_i32 = arith.constant 0 : i32
    %c0_i32_0 = arith.constant 0 : i32
    %c0_i32_1 = arith.constant 0 : i32
    return %c0_i32, %c0_i32_0 : i32, i32
  }
  func.func @transform_4(%arg0: i32) -> (i32, i32) {
    %c0_i32 = arith.constant 0 : i32
    %c0_i32_0 = arith.constant 0 : i32
    %c0_i32_1 = arith.constant 0 : i32
    return %c0_i32, %c0_i32_0 : i32, i32
  }
  func.func @transform_5(%arg0: i32) -> (i32, i32) {
    %c0_i32 = arith.constant 0 : i32
    %c0_i32_0 = arith.constant 0 : i32
    %c0_i32_1 = arith.constant 0 : i32
    return %c0_i32, %c0_i32_0 : i32, i32
  }
  func.func @transform_6(%arg0: i32) -> (i32, i32) {
    %c0_i32 = arith.constant 0 : i32
    %c0_i32_0 = arith.constant 0 : i32
    %c0_i32_1 = arith.constant 0 : i32
    return %c0_i32, %c0_i32_0 : i32, i32
  }
  func.func @transform_7(%arg0: i32) -> (i32, i32) {
    %c0_i32 = arith.constant 0 : i32
    %c0_i32_0 = arith.constant 0 : i32
    %c0_i32_1 = arith.constant 0 : i32
    return %c0_i32, %c0_i32_0 : i32, i32
  }
  func.func @transform_8(%arg0: i32) -> (i32, i32) {
    %c0_i32 = arith.constant 0 : i32
    %c0_i32_0 = arith.constant 0 : i32
    %c0_i32_1 = arith.constant 0 : i32
    return %c0_i32, %c0_i32_0 : i32, i32
  }
  func.func @transform_9(%arg0: i32) -> (i32, i32) {
    %c0_i32 = arith.constant 0 : i32
    %c0_i32_0 = arith.constant 0 : i32
    return %c0_i32, %arg0 : i32, i32
  }
}

</mosaic_0001>

<llo_original>
// kernel: deep_catboost_forward.1
$region0: #{deep_catboost_forward.1}
  #allocation0 [shape = 'u32[]', space=smem, size = 0x4, offset = 0x4, fixed_abs, tag = 'smem constant byte address 0x4 - core index']
  #allocation1 [shape = 'u32[144,128]{1,0:T(1,128)}', space=vmem, size = 0x12000, scoped, tag = 'internal scratch']
  %s0 = inlined_call_operand.vmem [shape: s32[4,1024], index: 0, kind: input, shape index: {}]
  %s1 = inlined_call_operand.vmem [shape: f32[36,4], index: 1, kind: input, shape index: {}]
  %s2 = inlined_call_operand.vmem [shape: bf16[32,36], index: 2, kind: input, shape index: {}]
  %s3 = inlined_call_operand.vmem [shape: f32[8,32], index: 3, kind: input, shape index: {}]
  %s4 = inlined_call_operand.vmem [shape: f32[32,3], index: 4, kind: input, shape index: {}]
  %s5 = inlined_call_operand.vmem [shape: bf16[64,32], index: 5, kind: input, shape index: {}]
  %s6 = inlined_call_operand.vmem [shape: bf16[32,64], index: 6, kind: input, shape index: {}]
  %s7 = inlined_call_operand.vmem [shape: f32[96,1], index: 7, kind: input, shape index: {}]
  %s8 = inlined_call_operand.vmem [shape: f32[8,32], index: 8, kind: input, shape index: {}]
  %s9 = inlined_call_operand.vmem [shape: f32[1,1024], index: 9, kind: output, shape index: {}]
  %s10 = sld [smem:[#allocation0]]
  $region69: #{deep_catboost_forward.1} parent=0
    _
  %s12 = ssub.s32 1, %s10
  %s13 = scalar_select 0, %s12, %s10
  loop: start=0, step=1, limit=4
  $region2: #{deep_catboost_forward.1} parent=0 // loop_pre_header
    _
  $region3: #{deep_catboost_forward.1} parent=0 // loop_header
    %s15 = sphi 0, %s19
    %p16 = scmp.ge.s32.totalorder %s15, 4
    %s25 = sphi 0, %s27
    %s28 = sphi 0, %s25
    %s29 = sphi 0, %s28
    %s45 = sphi 0, %s29
    %s49 = sphi 0, %s49
    %s51 = sphi 0, %s49
    %s52 = sphi 0, %s51
    %s66 = sphi 0, %s52
    %s70 = sphi 0, %s70
    %s72 = sphi 0, %s70
    %s73 = sphi 0, %s72
    %s87 = sphi 0, %s73
    %s91 = sphi 0, %s91
    %s93 = sphi 0, %s91
    %s94 = sphi 0, %s93
    %s108 = sphi 0, %s94
    %s112 = sphi 0, %s112
    %s114 = sphi 0, %s112
    %s115 = sphi 0, %s114
    %s129 = sphi 0, %s115
    %s133 = sphi 0, %s133
    %s135 = sphi 0, %s133
    %s136 = sphi 0, %s135
    %s150 = sphi 0, %s136
    %s154 = sphi 0, %s154
    %s156 = sphi 0, %s154
    %s157 = sphi 0, %s156
    %s171 = sphi 0, %s157
    %s175 = sphi 0, %s175
    %s177 = sphi 0, %s175
    %s178 = sphi 0, %s177
    %s192 = sphi 0, %s178
    %s196 = sphi 0, %s196
    %s198 = sphi 0, %s196
    %s199 = sphi 0, %s198
    %s213 = sphi 0, %s199
    %s219 = sphi 0, %s221
    %s222 = sphi 0, %s219
    %s223 = sphi 0, %s222
    %s239 = sphi 0, %s223
  $region4: #{deep_catboost_forward.1} parent=0 // loop_header_branch
    %18 = sbr.rel (%p16) target = $region8
  $region5: #{deep_catboost_forward.1} parent=0 // loop_body
    %s20 = ssub.s32 %s15, 1
    %s21 = ssub.s32 %s15, 2
    %s22 = sadd.s32 %s15, 1
    %s23 = ssub.s32 %s15, %s22
    %p24 = scmp.eq.s32.totalorder %s23, 0
    %s26 = sadd.s32 %s25, 1
    %s27 = scalar_select %p24, %s25, %s26
    %p30 = pneg %p24
    %p31 = scmp.eq.s32.totalorder %s15, 1
    %p32 = por %p30, %p31
    %p33 = scmp.ne.s32.totalorder %s25, %s28
    %p34 = scmp.eq.s32.totalorder %s15, 0
    %p35 = por %p33, %p34
    %p36 = scmp.ne.s32.totalorder %s25, %s28
    %p37 = scmp.eq.s32.totalorder %s20, 1
    %p38 = por %p36, %p37
    %p39 = scmp.ne.s32.totalorder %s28, %s29
    %p40 = scmp.eq.s32.totalorder %s20, 0
    %p41 = por %p39, %p40
    %p42 = scmp.ne.s32.totalorder %s28, %s29
    %p43 = scmp.eq.s32.totalorder %s21, 1
    %p44 = por %p42, %p43
    %p46 = scmp.ne.s32.totalorder %s29, %s45
    %p47 = scmp.eq.s32.totalorder %s21, 0
    %p48 = por %p46, %p47
    %s50 = sadd.s32 %s49, 1
    %p53 = scmp.eq.s32.totalorder %s15, 1
    %p54 = scmp.ne.s32.totalorder %s49, %s51
    %p55 = scmp.eq.s32.totalorder %s15, 0
    %p56 = por %p54, %p55
    %p57 = scmp.ne.s32.totalorder %s49, %s51
    %p58 = scmp.eq.s32.totalorder %s20, 1
    %p59 = por %p57, %p58
    %p60 = scmp.ne.s32.totalorder %s51, %s52
    %p61 = scmp.eq.s32.totalorder %s20, 0
    %p62 = por %p60, %p61
    %p63 = scmp.ne.s32.totalorder %s51, %s52
    %p64 = scmp.eq.s32.totalorder %s21, 1
    %p65 = por %p63, %p64
    %p67 = scmp.ne.s32.totalorder %s52, %s66
    %p68 = scmp.eq.s32.totalorder %s21, 0
    %p69 = por %p67, %p68
    %s71 = sadd.s32 %s70, 1
    %p74 = scmp.eq.s32.totalorder %s15, 1
    %p75 = scmp.ne.s32.totalorder %s70, %s72
    %p76 = scmp.eq.s32.totalorder %s15, 0
    %p77 = por %p75, %p76
    %p78 = scmp.ne.s32.totalorder %s70, %s72
    %p79 = scmp.eq.s32.totalorder %s20, 1
    %p80 = por %p78, %p79
    %p81 = scmp.ne.s32.totalorder %s72, %s73
    %p82 = scmp.eq.s32.totalorder %s20, 0
    %p83 = por %p81, %p82
    %p84 = scmp.ne.s32.totalorder %s72, %s73
    %p85 = scmp.eq.s32.totalorder %s21, 1
    %p86 = por %p84, %p85
    %p88 = scmp.ne.s32.totalorder %s73, %s87
    %p89 = scmp.eq.s32.totalorder %s21, 0
    %p90 = por %p88, %p89
    %s92 = sadd.s32 %s91, 1
    %p95 = scmp.eq.s32.totalorder %s15, 1
    %p96 = scmp.ne.s32.totalorder %s91, %s93
    %p97 = scmp.eq.s32.totalorder %s15, 0
    %p98 = por %p96, %p97
    %p99 = scmp.ne.s32.totalorder %s91, %s93
    %p100 = scmp.eq.s32.totalorder %s20, 1
    %p101 = por %p99, %p100
    %p102 = scmp.ne.s32.totalorder %s93, %s94
    %p103 = scmp.eq.s32.totalorder %s20, 0
    %p104 = por %p102, %p103
    %p105 = scmp.ne.s32.totalorder %s93, %s94
    %p106 = scmp.eq.s32.totalorder %s21, 1
    %p107 = por %p105, %p106
    %p109 = scmp.ne.s32.totalorder %s94, %s108
    %p110 = scmp.eq.s32.totalorder %s21, 0
    %p111 = por %p109, %p110
    %s113 = sadd.s32 %s112, 1
    %p116 = scmp.eq.s32.totalorder %s15, 1
    %p117 = scmp.ne.s32.totalorder %s112, %s114
    %p118 = scmp.eq.s32.totalorder %s15, 0
    %p119 = por %p117, %p118
    %p120 = scmp.ne.s32.totalorder %s112, %s114
    %p121 = scmp.eq.s32.totalorder %s20, 1
    %p122 = por %p120, %p121
    %p123 = scmp.ne.s32.totalorder %s114, %s115
    %p124 = scmp.eq.s32.totalorder %s20, 0
    %p125 = por %p123, %p124
    %p126 = scmp.ne.s32.totalorder %s114, %s115
    %p127 = scmp.eq.s32.totalorder %s21, 1
    %p128 = por %p126, %p127
    %p130 = scmp.ne.s32.totalorder %s115, %s129
    %p131 = scmp.eq.s32.totalorder %s21, 0
    %p132 = por %p130, %p131
    %s134 = sadd.s32 %s133, 1
    %p137 = scmp.eq.s32.totalorder %s15, 1
    %p138 = scmp.ne.s32.totalorder %s133, %s135
    %p139 = scmp.eq.s32.totalorder %s15, 0
    %p140 = por %p138, %p139
    %p141 = scmp.ne.s32.totalorder %s133, %s135
    %p142 = scmp.eq.s32.totalorder %s20, 1
    %p143 = por %p141, %p142
    %p144 = scmp.ne.s32.totalorder %s135, %s136
    %p145 = scmp.eq.s32.totalorder %s20, 0
    %p146 = por %p144, %p145
    %p147 = scmp.ne.s32.totalorder %s135, %s136
    %p148 = scmp.eq.s32.totalorder %s21, 1
    %p149 = por %p147, %p148
    %p151 = scmp.ne.s32.totalorder %s136, %s150
    %p152 = scmp.eq.s32.totalorder %s21, 0
    %p153 = por %p151, %p152
    %s155 = sadd.s32 %s154, 1
    %p158 = scmp.eq.s32.totalorder %s15, 1
    %p159 = scmp.ne.s32.totalorder %s154, %s156
    %p160 = scmp.eq.s32.totalorder %s15, 0
    %p161 = por %p159, %p160
    %p162 = scmp.ne.s32.totalorder %s154, %s156
    %p163 = scmp.eq.s32.totalorder %s20, 1
    %p164 = por %p162, %p163
    %p165 = scmp.ne.s32.totalorder %s156, %s157
    %p166 = scmp.eq.s32.totalorder %s20, 0
    %p167 = por %p165, %p166
    %p168 = scmp.ne.s32.totalorder %s156, %s157
    %p169 = scmp.eq.s32.totalorder %s21, 1
    %p170 = por %p168, %p169
    %p172 = scmp.ne.s32.totalorder %s157, %s171
    %p173 = scmp.eq.s32.totalorder %s21, 0
    %p174 = por %p172, %p173
    %s176 = sadd.s32 %s175, 1
    %p179 = scmp.eq.s32.totalorder %s15, 1
    %p180 = scmp.ne.s32.totalorder %s175, %s177
    %p181 = scmp.eq.s32.totalorder %s15, 0
    %p182 = por %p180, %p181
    %p183 = scmp.ne.s32.totalorder %s175, %s177
    %p184 = scmp.eq.s32.totalorder %s20, 1
    %p185 = por %p183, %p184
    %p186 = scmp.ne.s32.totalorder %s177, %s178
    %p187 = scmp.eq.s32.totalorder %s20, 0
    %p188 = por %p186, %p187
    %p189 = scmp.ne.s32.totalorder %s177, %s178
    %p190 = scmp.eq.s32.totalorder %s21, 1
    %p191 = por %p189, %p190
    %p193 = scmp.ne.s32.totalorder %s178, %s192
    %p194 = scmp.eq.s32.totalorder %s21, 0
    %p195 = por %p193, %p194
    %s197 = sadd.s32 %s196, 1
    %p200 = scmp.eq.s32.totalorder %s15, 1
    %p201 = scmp.ne.s32.totalorder %s196, %s198
    %p202 = scmp.eq.s32.totalorder %s15, 0
    %p203 = por %p201, %p202
    %p204 = scmp.ne.s32.totalorder %s196, %s198
    %p205 = scmp.eq.s32.totalorder %s20, 1
    %p206 = por %p204, %p205
    %p207 = scmp.ne.s32.totalorder %s198, %s199
    %p208 = scmp.eq.s32.totalorder %s20, 0
    %p209 = por %p207, %p208
    %p210 = scmp.ne.s32.totalorder %s198, %s199
    %p211 = scmp.eq.s32.totalorder %s21, 1
    %p212 = por %p210, %p211
    %p214 = scmp.ne.s32.totalorder %s199, %s213
    %p215 = scmp.eq.s32.totalorder %s21, 0
    %p216 = por %p214, %p215
    %s217 = ssub.s32 %s15, %s22
    %p218 = scmp.eq.s32.totalorder %s217, 0
    %s220 = sadd.s32 %s219, 1
    %s221 = scalar_select %p218, %s219, %s220
    %p224 = pneg %p218
    %p225 = scmp.eq.s32.totalorder %s15, 1
    %p226 = por %p224, %p225
    %p227 = scmp.ne.s32.totalorder %s219, %s222
    %p228 = scmp.eq.s32.totalorder %s15, 0
    %p229 = por %p227, %p228
    %p230 = scmp.ne.s32.totalorder %s219, %s222
    %p231 = scmp.eq.s32.totalorder %s20, 1
    %p232 = por %p230, %p231
    %p233 = scmp.ne.s32.totalorder %s222, %s223
    %p234 = scmp.eq.s32.totalorder %s20, 0
    %p235 = por %p233, %p234
    %p236 = scmp.ne.s32.totalorder %s222, %s223
    %p237 = scmp.eq.s32.totalorder %s21, 1
    %p238 = por %p236, %p237
    %p240 = scmp.ne.s32.totalorder %s223, %s239
    %p241 = scmp.eq.s32.totalorder %s21, 0
    %p242 = por %p240, %p241
    %p243 = scmp.le.s32.totalorder 1, %s15
    %p244 = scmp.lt.s32.totalorder %s15, 3
    %p245 = pnand %p243, %p244
    %p246 = pneg %p245
    // Predicated region
    $region9: #{deep_catboost_forward.1} parent=5 // pred_check
      _
    $region10: #{deep_catboost_forward.1} parent=5 // pred_check_branch
      %248 = sbr.rel (%p245) target = $region12
    $region11: #{deep_catboost_forward.1} parent=5 // pred_region
      %s249 = ssub.s32 %s15, 1
      // Predicated region
      $region13: #{deep_catboost_forward.1} parent=11 // pred_check
        %p250 = pneg %p62
      $region14: #{deep_catboost_forward.1} parent=11 // pred_check_branch
        %252 = sbr.rel (%p250) target = $region16
      $region15: #{deep_catboost_forward.1} parent=11 // pred_region
        _
      $region16: #{deep_catboost_forward.1} parent=11 // pred_fallthru
        _
      // Predicated region
      $region17: #{deep_catboost_forward.1} parent=11 // pred_check
        %p253 = pneg %p83
      $region18: #{deep_catboost_forward.1} parent=11 // pred_check_branch
        %255 = sbr.rel (%p253) target = $region20
      $region19: #{deep_catboost_forward.1} parent=11 // pred_region
        _
      $region20: #{deep_catboost_forward.1} parent=11 // pred_fallthru
        _
      // Predicated region
      $region21: #{deep_catboost_forward.1} parent=11 // pred_check
        %p256 = pneg %p104
      $region22: #{deep_catboost_forward.1} parent=11 // pred_check_branch
        %258 = sbr.rel (%p256) target = $region24
      $region23: #{deep_catboost_forward.1} parent=11 // pred_region
        _
      $region24: #{deep_catboost_forward.1} parent=11 // pred_fallthru
        _
      // Predicated region
      $region25: #{deep_catboost_forward.1} parent=11 // pred_check
        %p259 = pneg %p125
      $region26: #{deep_catboost_forward.1} parent=11 // pred_check_branch
        %261 = sbr.rel (%p259) target = $region28
      $region27: #{deep_catboost_forward.1} parent=11 // pred_region
        _
      $region28: #{deep_catboost_forward.1} parent=11 // pred_fallthru
        _
      // Predicated region
      $region29: #{deep_catboost_forward.1} parent=11 // pred_check
        %p262 = pneg %p146
      $region30: #{deep_catboost_forward.1} parent=11 // pred_check_branch
        %264 = sbr.rel (%p262) target = $region32
      $region31: #{deep_catboost_forward.1} parent=11 // pred_region
        _
      $region32: #{deep_catboost_forward.1} parent=11 // pred_fallthru
        _
      // Predicated region
      $region33: #{deep_catboost_forward.1} parent=11 // pred_check
        %p265 = pneg %p167
      $region34: #{deep_catboost_forward.1} parent=11 // pred_check_branch
        %267 = sbr.rel (%p265) target = $region36
      $region35: #{deep_catboost_forward.1} parent=11 // pred_region
        _
      $region36: #{deep_catboost_forward.1} parent=11 // pred_fallthru
        _
      // Predicated region
      $region37: #{deep_catboost_forward.1} parent=11 // pred_check
        %p268 = pneg %p188
      $region38: #{deep_catboost_forward.1} parent=11 // pred_check_branch
        %270 = sbr.rel (%p268) target = $region40
      $region39: #{deep_catboost_forward.1} parent=11 // pred_region
        _
      $region40: #{deep_catboost_forward.1} parent=11 // pred_fallthru
        _
      // Predicated region
      $region41: #{deep_catboost_forward.1} parent=11 // pred_check
        %p271 = pneg %p209
      $region42: #{deep_catboost_forward.1} parent=11 // pred_check_branch
        %273 = sbr.rel (%p271) target = $region44
      $region43: #{deep_catboost_forward.1} parent=11 // pred_region
        _
      $region44: #{deep_catboost_forward.1} parent=11 // pred_fallthru
        _
    $region12: #{deep_catboost_forward.1} parent=5 // pred_fallthru
      _
    %p274 = scmp.lt.s32.totalorder %s15, 2
    // Predicated region
    $region45: #{deep_catboost_forward.1} parent=5 // pred_check
      %p275 = pneg %p274
    $region46: #{deep_catboost_forward.1} parent=5 // pred_check_branch
      %277 = sbr.rel (%p275) target = $region48
    $region47: #{deep_catboost_forward.1} parent=5 // pred_region
      // Predicated region
      $region49: #{deep_catboost_forward.1} parent=47 // pred_check
        %p278 = pneg %p35
      $region50: #{deep_catboost_forward.1} parent=47 // pred_check_branch
        %280 = sbr.rel (%p278) target = $region52
      $region51: #{deep_catboost_forward.1} parent=47 // pred_region
        %s281 = smul.u32 4, %s15
        %p282 = scmp.lt.s32.totalorder %s281, 7
        %s283 = scalar_select %p282, %s281, 7
        %s284 = smul.addr %s283, 4
        %s285 = scalar_lea.vmem %s0, %s284
        %s286 = smul.u32 4, %s15
      $region52: #{deep_catboost_forward.1} parent=47 // pred_fallthru
        _
    $region48: #{deep_catboost_forward.1} parent=5 // pred_fallthru
      _
    %p287 = scmp.le.s32.totalorder 1, %s15
    %p288 = scmp.lt.s32.totalorder %s15, 3
    %p289 = pnand %p287, %p288
    %p290 = pneg %p289
    // Predicated region
    $region53: #{deep_catboost_forward.1} parent=5 // pred_check
      _
    $region54: #{deep_catboost_forward.1} parent=5 // pred_check_branch
      %292 = sbr.rel (%p289) target = $region56
    $region55: #{deep_catboost_forward.1} parent=5 // pred_region
      %s293 = ssub.s32 %s15, 1
      %s294 = smul.u32 4, %s20
      %p295 = scmp.lt.s32.totalorder %s294, 7
      %s296 = scalar_select %p295, %s294, 7
      %s297 = smul.addr %s296, 4
      %s298 = scalar_lea.vmem %s0, %s297
      %p299 = pneg %p41
      %p300 = pneg %p38
      %p301 = pneg %p62
      %p302 = pneg %p59
      %p303 = pneg %p83
      %p304 = pneg %p80
      %p305 = pneg %p104
      %p306 = pneg %p101
      %p307 = pneg %p125
      %p308 = pneg %p122
      %p309 = pneg %p146
      %p310 = pneg %p143
      %p311 = pneg %p167
      %p312 = pneg %p164
      %p313 = pneg %p188
      %p314 = pneg %p185
      %p315 = pneg %p209
      %p316 = pneg %p206
      %p317 = pneg %p235
      %p318 = pneg %p232
      %s319 = smul.u32 4, %s20
      %p320 = scmp.lt.s32.totalorder %s319, 7
      %s321 = scalar_select %p320, %s319, 7
      %s322 = scalar_lea.vmem %s9, %s321
      %s323 = smul.u32 4, %s20
      %p324 = scmp.lt.s32.totalorder %s323, 7
      %s325 = scalar_select %p324, %s323, 7
      %s326 = smul.addr %s325, 4
      %s327 = scalar_lea.vmem %s0, %s326
      %s328 = smul.u32 4, %s20
      %s329 = smul.u32 4, %s20
      %p330 = scmp.lt.s32.totalorder %s329, 7
      %s331 = scalar_select %p330, %s329, 7
      %s332 = scalar_lea.vmem %s9, %s331
      %s333 = smul.u32 4, %s20
      %v335 = vld [vmem:[%s327] sm:$0xff]
      %v336 = vld [vmem:[%s327 + $0x8] sm:$0xff]
      %v337 = vcvt.s32.f32 %v335
      %v338 = vcvt.s32.f32 %v336
      %v339 = vld [vmem:[%s1] sm:$0xff]
      %v340 = vld [vmem:[%s1 + $0x8] sm:$0xff]
      %v341 = vld [vmem:[%s1 + $0x10] sm:$0xff]
      %v342 = vld [vmem:[%s1 + $0x18] sm:$0xff]
      %v343 = vld [vmem:[%s1 + $0x20] sm:$0xf]
      %v346 = vcombine.high %v337, %v337
      %v347 = vcombine.high %v338, %v338
      %vm348 = vcmask 31744
      %v350 = vsel %vm348, %v339, 0
      %v353 = vsel %vm348, %v340, 0
      %v356 = vsel %vm348, %v341, 0
      %v359 = vsel %vm348, %v342, 0
      %v362 = vsel %vm348, %v343, 0
      %vm364 = vcmask 1043456
      %v365 = vsel %vm364, %v337, 0
      %v367 = vsel %vm364, %v346, 0
      %v369 = vsel %vm364, %v338, 0
      %v371 = vsel %vm364, %v347, 0
      %373 = vmatprep.subr.mxu0 %v367
      %374 = vmatpush1.msra.mxu0 %v365
      %375 = vmatprep.subr.mxu0 0.0
      %376 = vmatpush1.msra.mxu0 0.0
      %377 = vmatprep.subr.mxu0 0.0
      %378 = vmatpush1.msra.mxu0 0.0
      %379 = vmatprep.subr.mxu0 0.0
      %380 = vmatpush1.msra.mxu0 0.0
      %381 = vmatprep.subr.mxu0 0.0
      %382 = vmatpush1.msra.mxu0 0.0
      %383 = vmatprep.subr.mxu0 0.0
      %384 = vmatpush1.msra.mxu0 0.0
      %385 = vmatprep.subr.mxu0 0.0
      %386 = vmatpush1.msra.mxu0 0.0
      %387 = vmatprep.subr.mxu0 0.0
      %388 = vmatpush1.msra.mxu0 0.0
      %389 = vmatprep.subr.mxu0 0.0
      %390 = vmatpush1.msra.mxu0 0.0
      %391 = vmatprep.subr.mxu0 0.0
      %392 = vmatpush1.msra.mxu0 0.0
      %393 = vmatprep.subr.mxu0 0.0
      %394 = vmatpush1.msra.mxu0 0.0
      %395 = vmatprep.subr.mxu0 0.0
      %396 = vmatpush1.msra.mxu0 0.0
      %397 = vmatprep.subr.mxu0 0.0
      %398 = vmatpush1.msra.mxu0 0.0
      %399 = vmatprep.subr.mxu0 0.0
      %400 = vmatpush1.msra.mxu0 0.0
      %401 = vmatprep.subr.mxu0 0.0
      %402 = vmatpush1.msra.mxu0 0.0
      %403 = vmatprep.subr.mxu0 0.0
      %404 = vmatpush1.msra.mxu0 0.0
      %405 = vmatprep.subr.mxu0 0.0
      %406 = vmatpush1.msra.mxu0 0.0
      %407 = vmatprep.subr.mxu0 0.0
      %408 = vmatpush1.msra.mxu0 0.0
      %409 = vmatprep.subr.mxu0 0.0
      %410 = vmatpush1.msra.mxu0 0.0
      %411 = vmatprep.subr.mxu0 0.0
      %412 = vmatpush1.msra.mxu0 0.0
      %413 = vmatprep.subr.mxu0 0.0
      %414 = vmatpush1.msra.mxu0 0.0
      %415 = vmatprep.subr.mxu0 0.0
      %416 = vmatpush1.msra.mxu0 0.0
      %417 = vmatprep.subr.mxu0 0.0
      %418 = vmatpush1.msra.mxu0 0.0
      %419 = vmatprep.subr.mxu0 0.0
      %420 = vmatpush1.msra.mxu0 0.0
      %421 = vmatprep.subr.mxu0 0.0
      %422 = vmatpush1.msra.mxu0 0.0
      %423 = vmatprep.subr.mxu0 0.0
      %424 = vmatpush1.msra.mxu0 0.0
      %425 = vmatprep.subr.mxu0 0.0
      %426 = vmatpush1.msra.mxu0 0.0
      %427 = vmatprep.subr.mxu0 0.0
      %428 = vmatpush1.msra.mxu0 0.0
      %429 = vmatprep.subr.mxu0 0.0
      %430 = vmatpush1.msra.mxu0 0.0
      %431 = vmatprep.subr.mxu0 0.0
      %432 = vmatpush1.msra.mxu0 0.0
      %433 = vmatprep.subr.mxu0 0.0
      %434 = vmatpush1.msra.mxu0 0.0
      %435 = vmatprep.subr.mxu0 0.0
      %436 = vmatpush1.msra.mxu0 0.0
      %437 = vmatprep.mubr.f32.mxu0 0.0
      %438 = vmatmul.mubr.f32.gmra.mrb[0].mxu0 %v350
      %v439 = vpop.f32.mrb[0].mxu0
      %v440 = vadd.f32 0.0, %v439
      %v441 = vpop.f32.mrb[0].mxu0
      %v442 = vadd.f32 0.0, %v441
      %443 = vmatprep.mubr.f32.mxu0 0.0
      %444 = vmatmul.mubr.f32.gmra.mrb[0].mxu0 %v353
      %v445 = vpop.f32.mrb[0].mxu0
      %v446 = vadd.f32 0.0, %v445
      %v447 = vpop.f32.mrb[0].mxu0
      %v448 = vadd.f32 0.0, %v447
      %449 = vmatprep.mubr.f32.mxu0 0.0
      %450 = vmatmul.mubr.f32.gmra.mrb[0].mxu0 %v356
      %v451 = vpop.f32.mrb[0].mxu0
      %v452 = vadd.f32 0.0, %v451
      %v453 = vpop.f32.mrb[0].mxu0
      %v454 = vadd.f32 0.0, %v453
      %455 = vmatprep.mubr.f32.mxu0 0.0
      %456 = vmatmul.mubr.f32.gmra.mrb[0].mxu0 %v359
      %v457 = vpop.f32.mrb[0].mxu0
      %v458 = vadd.f32 0.0, %v457
      %v459 = vpop.f32.mrb[0].mxu0
      %v460 = vadd.f32 0.0, %v459
      %461 = vmatprep.mubr.f32.mxu0 0.0
      %462 = vmatmul.mubr.f32.gmra.mrb[0].mxu0 %v362
      %v463 = vpop.f32.mrb[0].mxu0
      %v464 = vadd.f32 0.0, %v463
      %v465 = vpop.f32.mrb[0].mxu0
      %v466 = vadd.f32 0.0, %v465
      %467 = vdwg.mxu0
      %468 = vmatprep.subr.mxu0 %v371
      %469 = vmatpush1.msra.mxu0 %v369
      %470 = vmatprep.subr.mxu0 0.0
      %471 = vmatpush1.msra.mxu0 0.0
      %472 = vmatprep.subr.mxu0 0.0
      %473 = vmatpush1.msra.mxu0 0.0
      %474 = vmatprep.subr.mxu0 0.0
      %475 = vmatpush1.msra.mxu0 0.0
      %476 = vmatprep.subr.mxu0 0.0
      %477 = vmatpush1.msra.mxu0 0.0
      %478 = vmatprep.subr.mxu0 0.0
      %479 = vmatpush1.msra.mxu0 0.0
      %480 = vmatprep.subr.mxu0 0.0
      %481 = vmatpush1.msra.mxu0 0.0
      %482 = vmatprep.subr.mxu0 0.0
      %483 = vmatpush1.msra.mxu0 0.0
      %484 = vmatprep.subr.mxu0 0.0
      %485 = vmatpush1.msra.mxu0 0.0
      %486 = vmatprep.subr.mxu0 0.0
      %487 = vmatpush1.msra.mxu0 0.0
      %488 = vmatprep.subr.mxu0 0.0
      %489 = vmatpush1.msra.mxu0 0.0
      %490 = vmatprep.subr.mxu0 0.0
      %491 = vmatpush1.msra.mxu0 0.0
      %492 = vmatprep.subr.mxu0 0.0
      %493 = vmatpush1.msra.mxu0 0.0
      %494 = vmatprep.subr.mxu0 0.0
      %495 = vmatpush1.msra.mxu0 0.0
      %496 = vmatprep.subr.mxu0 0.0
      %497 = vmatpush1.msra.mxu0 0.0
      %498 = vmatprep.subr.mxu0 0.0
      %499 = vmatpush1.msra.mxu0 0.0
      %500 = vmatprep.subr.mxu0 0.0
      %501 = vmatpush1.msra.mxu0 0.0
      %502 = vmatprep.subr.mxu0 0.0
      %503 = vmatpush1.msra.mxu0 0.0
      %504 = vmatprep.subr.mxu0 0.0
      %505 = vmatpush1.msra.mxu0 0.0
      %506 = vmatprep.subr.mxu0 0.0
      %507 = vmatpush1.msra.mxu0 0.0
      %508 = vmatprep.subr.mxu0 0.0
      %509 = vmatpush1.msra.mxu0 0.0
      %510 = vmatprep.subr.mxu0 0.0
      %511 = vmatpush1.msra.mxu0 0.0
      %512 = vmatprep.subr.mxu0 0.0
      %513 = vmatpush1.msra.mxu0 0.0
      %514 = vmatprep.subr.mxu0 0.0
      %515 = vmatpush1.msra.mxu0 0.0
      %516 = vmatprep.subr.mxu0 0.0
      %517 = vmatpush1.msra.mxu0 0.0
      %518 = vmatprep.subr.mxu0 0.0
      %519 = vmatpush1.msra.mxu0 0.0
      %520 = vmatprep.subr.mxu0 0.0
      %521 = vmatpush1.msra.mxu0 0.0
      %522 = vmatprep.subr.mxu0 0.0
      %523 = vmatpush1.msra.mxu0 0.0
      %524 = vmatprep.subr.mxu0 0.0
      %525 = vmatpush1.msra.mxu0 0.0
      %526 = vmatprep.subr.mxu0 0.0
      %527 = vmatpush1.msra.mxu0 0.0
      %528 = vmatprep.subr.mxu0 0.0
      %529 = vmatpush1.msra.mxu0 0.0
      %530 = vmatprep.subr.mxu0 0.0
      %531 = vmatpush1.msra.mxu0 0.0
      %532 = vmatprep.mubr.f32.mxu0 0.0
      %533 = vmatmul.mubr.f32.gmra.mrb[0].mxu0 %v350
      %v534 = vpop.f32.mrb[0].mxu0
      %v535 = vadd.f32 0.0, %v534
      %v536 = vpop.f32.mrb[0].mxu0
      %v537 = vadd.f32 0.0, %v536
      %538 = vmatprep.mubr.f32.mxu0 0.0
      %539 = vmatmul.mubr.f32.gmra.mrb[0].mxu0 %v353
      %v540 = vpop.f32.mrb[0].mxu0
      %v541 = vadd.f32 0.0, %v540
      %v542 = vpop.f32.mrb[0].mxu0
      %v543 = vadd.f32 0.0, %v542
      %544 = vmatprep.mubr.f32.mxu0 0.0
      %545 = vmatmul.mubr.f32.gmra.mrb[0].mxu0 %v356
      %v546 = vpop.f32.mrb[0].mxu0
      %v547 = vadd.f32 0.0, %v546
      %v548 = vpop.f32.mrb[0].mxu0
      %v549 = vadd.f32 0.0, %v548
      %550 = vmatprep.mubr.f32.mxu0 0.0
      %551 = vmatmul.mubr.f32.gmra.mrb[0].mxu0 %v359
      %v552 = vpop.f32.mrb[0].mxu0
      %v553 = vadd.f32 0.0, %v552
      %v554 = vpop.f32.mrb[0].mxu0
      %v555 = vadd.f32 0.0, %v554
      %556 = vmatprep.mubr.f32.mxu0 0.0
      %557 = vmatmul.mubr.f32.gmra.mrb[0].mxu0 %v362
      %v558 = vpop.f32.mrb[0].mxu0
      %v559 = vadd.f32 0.0, %v558
      %v560 = vpop.f32.mrb[0].mxu0
      %v561 = vadd.f32 0.0, %v560
      %562 = vdwg.mxu0
      %v563 = vlaneseq
      %v564 = vshrl.u32 %v563, 7
      %v565 = vadd.s32 %v564, 8
      %v566 = vadd.s32 %v564, 16
      %v567 = vadd.s32 %v564, 24
      %v568 = vadd.s32 %v564, 32
      %v569 = vcvt.f32.s32.to.zero.pseudo %v440
      %v570 = vcvt.f32.s32.to.zero.pseudo %v442
      %v571 = vcvt.f32.s32.to.zero.pseudo %v535
      %v572 = vcvt.f32.s32.to.zero.pseudo %v537
      %v573 = vcvt.f32.s32.to.zero.pseudo %v446
      %v574 = vcvt.f32.s32.to.zero.pseudo %v448
      %v575 = vcvt.f32.s32.to.zero.pseudo %v541
      %v576 = vcvt.f32.s32.to.zero.pseudo %v543
      %v577 = vcvt.f32.s32.to.zero.pseudo %v452
      %v578 = vcvt.f32.s32.to.zero.pseudo %v454
      %v579 = vcvt.f32.s32.to.zero.pseudo %v547
      %v580 = vcvt.f32.s32.to.zero.pseudo %v549
      %v581 = vcvt.f32.s32.to.zero.pseudo %v458
      %v582 = vcvt.f32.s32.to.zero.pseudo %v460
      %v583 = vcvt.f32.s32.to.zero.pseudo %v553
      %v584 = vcvt.f32.s32.to.zero.pseudo %v555
      %v585 = vcvt.f32.s32.to.zero.pseudo %v464
      %v586 = vcvt.f32.s32.to.zero.pseudo %v466
      %v587 = vcvt.f32.s32.to.zero.pseudo %v559
      %v588 = vcvt.f32.s32.to.zero.pseudo %v561
      %vm589 = vcmp.eq.s32.totalorder %v564, %v569
      %vm590 = vcmp.eq.s32.totalorder %v564, %v570
      %vm591 = vcmp.eq.s32.totalorder %v564, %v571
      %vm592 = vcmp.eq.s32.totalorder %v564, %v572
      %vm593 = vcmp.eq.s32.totalorder %v565, %v573
      %vm594 = vcmp.eq.s32.totalorder %v565, %v574
      %vm595 = vcmp.eq.s32.totalorder %v565, %v575
      %vm596 = vcmp.eq.s32.totalorder %v565, %v576
      %vm597 = vcmp.eq.s32.totalorder %v566, %v577
      %vm598 = vcmp.eq.s32.totalorder %v566, %v578
      %vm599 = vcmp.eq.s32.totalorder %v566, %v579
      %vm600 = vcmp.eq.s32.totalorder %v566, %v580
      %vm601 = vcmp.eq.s32.totalorder %v567, %v581
      %vm602 = vcmp.eq.s32.totalorder %v567, %v582
      %vm603 = vcmp.eq.s32.totalorder %v567, %v583
      %vm604 = vcmp.eq.s32.totalorder %v567, %v584
      %vm605 = vcmp.eq.s32.totalorder %v568, %v585
      %vm606 = vcmp.eq.s32.totalorder %v568, %v586
      %vm607 = vcmp.eq.s32.totalorder %v568, %v587
      %vm608 = vcmp.eq.s32.totalorder %v568, %v588
      %v609 = vsel %vm589, 1, 0
      %v610 = vsel %vm590, 1, 0
      %v611 = vsel %vm591, 1, 0
      %v612 = vsel %vm592, 1, 0
      %v613 = vsel %vm593, 1, 0
      %v614 = vsel %vm594, 1, 0
      %v615 = vsel %vm595, 1, 0
      %v616 = vsel %vm596, 1, 0
      %v617 = vsel %vm597, 1, 0
      %v618 = vsel %vm598, 1, 0
      %v619 = vsel %vm599, 1, 0
      %v620 = vsel %vm600, 1, 0
      %v621 = vsel %vm601, 1, 0
      %v622 = vsel %vm602, 1, 0
      %v623 = vsel %vm603, 1, 0
      %v624 = vsel %vm604, 1, 0
      %v625 = vsel %vm605, 1, 0
      %v626 = vsel %vm606, 1, 0
      %v627 = vsel %vm607, 1, 0
      %v628 = vsel %vm608, 1, 0
      %v629 = vcvt.s32.f32 %v609
      %v630 = vcvt.s32.f32 %v610
      %v631 = vcvt.s32.f32 %v611
      %v632 = vcvt.s32.f32 %v612
      %v633 = vcvt.s32.f32 %v613
      %v634 = vcvt.s32.f32 %v614
      %v635 = vcvt.s32.f32 %v615
      %v636 = vcvt.s32.f32 %v616
      %v637 = vcvt.s32.f32 %v617
      %v638 = vcvt.s32.f32 %v618
      %v639 = vcvt.s32.f32 %v619
      %v640 = vcvt.s32.f32 %v620
      %v641 = vcvt.s32.f32 %v621
      %v642 = vcvt.s32.f32 %v622
      %v643 = vcvt.s32.f32 %v623
      %v644 = vcvt.s32.f32 %v624
      %v645 = vcvt.s32.f32 %v625
      %v646 = vcvt.s32.f32 %v626
      %v647 = vcvt.s32.f32 %v627
      %v648 = vcvt.s32.f32 %v628
      %v649 = vpack.c.bf16 %v633, %v629
      %v650 = vpack.c.bf16 %v634, %v630
      %v651 = vpack.c.bf16 %v635, %v631
      %v652 = vpack.c.bf16 %v636, %v632
      %v653 = vpack.c.bf16 %v641, %v637
      %v654 = vpack.c.bf16 %v642, %v638
      %v655 = vpack.c.bf16 %v643, %v639
      %v656 = vpack.c.bf16 %v644, %v640
      %v657 = vpack.c.bf16 %v645, %v645
      %v658 = vpack.c.bf16 %v646, %v646
      %v659 = vpack.c.bf16 %v647, %v647
      %v660 = vpack.c.bf16 %v648, %v648
      %v661 = vld [vmem:[%s2] sm:$0xf]
      %v662 = vld [vmem:[%s2 + $0x4] sm:$0xf]
      %v663 = vld [vmem:[%s2 + $0x8] sm:$0xf]
      %v664 = vld [vmem:[%s2 + $0xc] sm:$0xf]
      %v669 = vunpack.c.l.b16 %v661
      %v670 = vunpack.c.l.b16 %v662
      %v671 = vunpack.c.l.b16 %v663
      %v672 = vunpack.c.l.b16 %v664
      %v673 = vpack.c.b16 %v670, %v669
      %v674 = vpack.c.b16 %v672, %v671
      %vm675 = vcmask 293888
      %v677 = vsel %vm675, %v673, 0
      %v680 = vsel %vm675, %v674, 0
      %vm682 = vcmask 1041408
      %v684 = vsel %vm682, %v657, 0
      %v687 = vsel %vm682, %v658, 0
      %v690 = vsel %vm682, %v659, 0
      %v693 = vsel %vm682, %v660, 0
      %695 = vmatprep.subr.bf16.mxu0 %v650
      %696 = vmatpush1.bf16.msra.mxu0 %v649
      %697 = vmatprep.subr.bf16.mxu0 %v654
      %698 = vmatpush1.bf16.msra.mxu0 %v653
      %699 = vmatprep.subr.bf16.mxu0 %v687
      %700 = vmatpush1.bf16.msra.mxu0 %v684
      %701 = vmatprep.subr.bf16.mxu0 0
      %702 = vmatpush1.bf16.msra.mxu0 0
      %703 = vmatprep.subr.bf16.mxu0 0
      %704 = vmatpush1.bf16.msra.mxu0 0
      %705 = vmatprep.subr.bf16.mxu0 0
      %706 = vmatpush1.bf16.msra.mxu0 0
      %707 = vmatprep.subr.bf16.mxu0 0
      %708 = vmatpush1.bf16.msra.mxu0 0
      %709 = vmatprep.subr.bf16.mxu0 0
      %710 = vmatpush1.bf16.msra.mxu0 0
      %711 = vmatprep.subr.bf16.mxu0 0
      %712 = vmatpush1.bf16.msra.mxu0 0
      %713 = vmatprep.subr.bf16.mxu0 0
      %714 = vmatpush1.bf16.msra.mxu0 0
      %715 = vmatprep.subr.bf16.mxu0 0
      %716 = vmatpush1.bf16.msra.mxu0 0
      %717 = vmatprep.subr.bf16.mxu0 0
      %718 = vmatpush1.bf16.msra.mxu0 0
      %719 = vmatprep.subr.bf16.mxu0 0
      %720 = vmatpush1.bf16.msra.mxu0 0
      %721 = vmatprep.subr.bf16.mxu0 0
      %722 = vmatpush1.bf16.msra.mxu0 0
      %723 = vmatprep.subr.bf16.mxu0 0
      %724 = vmatpush1.bf16.msra.mxu0 0
      %725 = vmatprep.subr.bf16.mxu0 0
      %726 = vmatpush1.bf16.msra.mxu0 0
      %727 = vmatprep.mubr.bf16.mxu0 0
      %728 = vmatmul.mubr.bf16.gmra.mrb[0].mxu0 %v677
      %v729 = vpop.f32.mrb[0].mxu0
      %v730 = vadd.f32 0.0, %v729
      %v731 = vpop.f32.mrb[0].mxu0
      %v732 = vadd.f32 0.0, %v731
      %v733 = vpop.f32.mrb[0].mxu0
      %v734 = vadd.f32 0.0, %v733
      %v735 = vpop.f32.mrb[0].mxu0
      %v736 = vadd.f32 0.0, %v735
      %737 = vmatprep.mubr.bf16.mxu0 0
      %738 = vmatmul.mubr.bf16.gmra.mrb[0].mxu0 %v680
      %v739 = vpop.f32.mrb[0].mxu0
      %v740 = vadd.f32 0.0, %v739
      %v741 = vpop.f32.mrb[0].mxu0
      %v742 = vadd.f32 0.0, %v741
      %v743 = vpop.f32.mrb[0].mxu0
      %v744 = vadd.f32 0.0, %v743
      %v745 = vpop.f32.mrb[0].mxu0
      %v746 = vadd.f32 0.0, %v745
      %747 = vdwg.mxu0
      %748 = vmatprep.subr.bf16.mxu0 %v652
      %749 = vmatpush1.bf16.msra.mxu0 %v651
      %750 = vmatprep.subr.bf16.mxu0 %v656
      %751 = vmatpush1.bf16.msra.mxu0 %v655
      %752 = vmatprep.subr.bf16.mxu0 %v693
      %753 = vmatpush1.bf16.msra.mxu0 %v690
      %754 = vmatprep.subr.bf16.mxu0 0
      %755 = vmatpush1.bf16.msra.mxu0 0
      %756 = vmatprep.subr.bf16.mxu0 0
      %757 = vmatpush1.bf16.msra.mxu0 0
      %758 = vmatprep.subr.bf16.mxu0 0
      %759 = vmatpush1.bf16.msra.mxu0 0
      %760 = vmatprep.subr.bf16.mxu0 0
      %761 = vmatpush1.bf16.msra.mxu0 0
      %762 = vmatprep.subr.bf16.mxu0 0
      %763 = vmatpush1.bf16.msra.mxu0 0
      %764 = vmatprep.subr.bf16.mxu0 0
      %765 = vmatpush1.bf16.msra.mxu0 0
      %766 = vmatprep.subr.bf16.mxu0 0
      %767 = vmatpush1.bf16.msra.mxu0 0
      %768 = vmatprep.subr.bf16.mxu0 0
      %769 = vmatpush1.bf16.msra.mxu0 0
      %770 = vmatprep.subr.bf16.mxu0 0
      %771 = vmatpush1.bf16.msra.mxu0 0
      %772 = vmatprep.subr.bf16.mxu0 0
      %773 = vmatpush1.bf16.msra.mxu0 0
      %774 = vmatprep.subr.bf16.mxu0 0
      %775 = vmatpush1.bf16.msra.mxu0 0
      %776 = vmatprep.subr.bf16.mxu0 0
      %777 = vmatpush1.bf16.msra.mxu0 0
      %778 = vmatprep.subr.bf16.mxu0 0
      %779 = vmatpush1.bf16.msra.mxu0 0
      %780 = vmatprep.mubr.bf16.mxu0 0
      %781 = vmatmul.mubr.bf16.gmra.mrb[0].mxu0 %v677
      %v782 = vpop.f32.mrb[0].mxu0
      %v783 = vadd.f32 0.0, %v782
      %v784 = vpop.f32.mrb[0].mxu0
      %v785 = vadd.f32 0.0, %v784
      %v786 = vpop.f32.mrb[0].mxu0
      %v787 = vadd.f32 0.0, %v786
      %v788 = vpop.f32.mrb[0].mxu0
      %v789 = vadd.f32 0.0, %v788
      %790 = vmatprep.mubr.bf16.mxu0 0
      %791 = vmatmul.mubr.bf16.gmra.mrb[0].mxu0 %v680
      %v792 = vpop.f32.mrb[0].mxu0
      %v793 = vadd.f32 0.0, %v792
      %v794 = vpop.f32.mrb[0].mxu0
      %v795 = vadd.f32 0.0, %v794
      %v796 = vpop.f32.mrb[0].mxu0
      %v797 = vadd.f32 0.0, %v796
      %v798 = vpop.f32.mrb[0].mxu0
      %v799 = vadd.f32 0.0, %v798
      %800 = vdwg.mxu0
      %v801 = vld [vmem:[%s3] sm:$0xff]
      %v802 = vld [vmem:[%s4] sm:$0xff]
      %v803 = vld [vmem:[%s4 + $0x8] sm:$0xff]
      %v804 = vld [vmem:[%s4 + $0x10] sm:$0xff]
      %v805 = vld [vmem:[%s4 + $0x18] sm:$0xff]
      %vm806 = vcmask 261120
      %v808 = vsel %vm806, %v801, 0
      %810 = vmatprep.subr.mxu0 %v732
      %811 = vmatpush1.msra.mxu0 %v730
      %812 = vmatprep.subr.mxu0 %v736
      %813 = vmatpush1.msra.mxu0 %v734
      %814 = vmatprep.subr.mxu0 %v742
      %815 = vmatpush1.msra.mxu0 %v740
      %816 = vmatprep.subr.mxu0 %v746
      %817 = vmatpush1.msra.mxu0 %v744
      %818 = vmatprep.subr.mxu0 0.0
      %819 = vmatpush1.msra.mxu0 0.0
      %820 = vmatprep.subr.mxu0 0.0
      %821 = vmatpush1.msra.mxu0 0.0
      %822 = vmatprep.subr.mxu0 0.0
      %823 = vmatpush1.msra.mxu0 0.0
      %824 = vmatprep.subr.mxu0 0.0
      %825 = vmatpush1.msra.mxu0 0.0
      %826 = vmatprep.subr.mxu0 0.0
      %827 = vmatpush1.msra.mxu0 0.0
      %828 = vmatprep.subr.mxu0 0.0
      %829 = vmatpush1.msra.mxu0 0.0
      %830 = vmatprep.subr.mxu0 0.0
      %831 = vmatpush1.msra.mxu0 0.0
      %832 = vmatprep.subr.mxu0 0.0
      %833 = vmatpush1.msra.mxu0 0.0
      %834 = vmatprep.subr.mxu0 0.0
      %835 = vmatpush1.msra.mxu0 0.0
      %836 = vmatprep.subr.mxu0 0.0
      %837 = vmatpush1.msra.mxu0 0.0
      %838 = vmatprep.subr.mxu0 0.0
      %839 = vmatpush1.msra.mxu0 0.0
      %840 = vmatprep.subr.mxu0 0.0
      %841 = vmatpush1.msra.mxu0 0.0
      %842 = vmatprep.subr.mxu0 0.0
      %843 = vmatpush1.msra.mxu0 0.0
      %844 = vmatprep.subr.mxu0 0.0
      %845 = vmatpush1.msra.mxu0 0.0
      %846 = vmatprep.subr.mxu0 0.0
      %847 = vmatpush1.msra.mxu0 0.0
      %848 = vmatprep.subr.mxu0 0.0
      %849 = vmatpush1.msra.mxu0 0.0
      %850 = vmatprep.subr.mxu0 0.0
      %851 = vmatpush1.msra.mxu0 0.0
      %852 = vmatprep.subr.mxu0 0.0
      %853 = vmatpush1.msra.mxu0 0.0
      %854 = vmatprep.subr.mxu0 0.0
      %855 = vmatpush1.msra.mxu0 0.0
      %856 = vmatprep.subr.mxu0 0.0
      %857 = vmatpush1.msra.mxu0 0.0
      %858 = vmatprep.subr.mxu0 0.0
      %859 = vmatpush1.msra.mxu0 0.0
      %860 = vmatprep.subr.mxu0 0.0
      %861 = vmatpush1.msra.mxu0 0.0
      %862 = vmatprep.subr.mxu0 0.0
      %863 = vmatpush1.msra.mxu0 0.0
      %864 = vmatprep.subr.mxu0 0.0
      %865 = vmatpush1.msra.mxu0 0.0
      %866 = vmatprep.subr.mxu0 0.0
      %867 = vmatpush1.msra.mxu0 0.0
      %868 = vmatprep.subr.mxu0 0.0
      %869 = vmatpush1.msra.mxu0 0.0
      %870 = vmatprep.subr.mxu0 0.0
      %871 = vmatpush1.msra.mxu0 0.0
      %872 = vmatprep.subr.mxu0 0.0
      %873 = vmatpush1.msra.mxu0 0.0
      %874 = vmatprep.mubr.f32.mxu0 0.0
      %875 = vmatmul.mubr.f32.gmra.mrb[0].mxu0 %v808
      %v876 = vpop.f32.mrb[0].mxu0
      %v877 = vadd.f32 0.0, %v876
      %v878 = vpop.f32.mrb[0].mxu0
      %v879 = vadd.f32 0.0, %v878
      %880 = vdwg.mxu0
      %881 = vmatprep.subr.mxu0 %v785
      %882 = vmatpush1.msra.mxu0 %v783
      %883 = vmatprep.subr.mxu0 %v789
      %884 = vmatpush1.msra.mxu0 %v787
      %885 = vmatprep.subr.mxu0 %v795
      %886 = vmatpush1.msra.mxu0 %v793
      %887 = vmatprep.subr.mxu0 %v799
      %888 = vmatpush1.msra.mxu0 %v797
      %889 = vmatprep.subr.mxu0 0.0
      %890 = vmatpush1.msra.mxu0 0.0
      %891 = vmatprep.subr.mxu0 0.0
      %892 = vmatpush1.msra.mxu0 0.0
      %893 = vmatprep.subr.mxu0 0.0
      %894 = vmatpush1.msra.mxu0 0.0
      %895 = vmatprep.subr.mxu0 0.0
      %896 = vmatpush1.msra.mxu0 0.0
      %897 = vmatprep.subr.mxu0 0.0
      %898 = vmatpush1.msra.mxu0 0.0
      %899 = vmatprep.subr.mxu0 0.0
      %900 = vmatpush1.msra.mxu0 0.0
      %901 = vmatprep.subr.mxu0 0.0
      %902 = vmatpush1.msra.mxu0 0.0
      %903 = vmatprep.subr.mxu0 0.0
      %904 = vmatpush1.msra.mxu0 0.0
      %905 = vmatprep.subr.mxu0 0.0
      %906 = vmatpush1.msra.mxu0 0.0
      %907 = vmatprep.subr.mxu0 0.0
      %908 = vmatpush1.msra.mxu0 0.0
      %909 = vmatprep.subr.mxu0 0.0
      %910 = vmatpush1.msra.mxu0 0.0
      %911 = vmatprep.subr.mxu0 0.0
      %912 = vmatpush1.msra.mxu0 0.0
      %913 = vmatprep.subr.mxu0 0.0
      %914 = vmatpush1.msra.mxu0 0.0
      %915 = vmatprep.subr.mxu0 0.0
      %916 = vmatpush1.msra.mxu0 0.0
      %917 = vmatprep.subr.mxu0 0.0
      %918 = vmatpush1.msra.mxu0 0.0
      %919 = vmatprep.subr.mxu0 0.0
      %920 = vmatpush1.msra.mxu0 0.0
      %921 = vmatprep.subr.mxu0 0.0
      %922 = vmatpush1.msra.mxu0 0.0
      %923 = vmatprep.subr.mxu0 0.0
      %924 = vmatpush1.msra.mxu0 0.0
      %925 = vmatprep.subr.mxu0 0.0
      %926 = vmatpush1.msra.mxu0 0.0
      %927 = vmatprep.subr.mxu0 0.0
      %928 = vmatpush1.msra.mxu0 0.0
      %929 = vmatprep.subr.mxu0 0.0
      %930 = vmatpush1.msra.mxu0 0.0
      %931 = vmatprep.subr.mxu0 0.0
      %932 = vmatpush1.msra.mxu0 0.0
      %933 = vmatprep.subr.mxu0 0.0
      %934 = vmatpush1.msra.mxu0 0.0
      %935 = vmatprep.subr.mxu0 0.0
      %936 = vmatpush1.msra.mxu0 0.0
      %937 = vmatprep.subr.mxu0 0.0
      %938 = vmatpush1.msra.mxu0 0.0
      %939 = vmatprep.subr.mxu0 0.0
      %940 = vmatpush1.msra.mxu0 0.0
      %941 = vmatprep.subr.mxu0 0.0
      %942 = vmatpush1.msra.mxu0 0.0
      %943 = vmatprep.subr.mxu0 0.0
      %944 = vmatpush1.msra.mxu0 0.0
      %945 = vmatprep.mubr.f32.mxu0 0.0
      %946 = vmatmul.mubr.f32.gmra.mrb[0].mxu0 %v808
      %v947 = vpop.f32.mrb[0].mxu0
      %v948 = vadd.f32 0.0, %v947
      %v949 = vpop.f32.mrb[0].mxu0
      %v950 = vadd.f32 0.0, %v949
      %951 = vdwg.mxu0
      %v952 = vlaneseq
      %v953 = vshrl.u32 %v952, 7
      %v954 = vsub.s32 0, %v953
      %v955 = vrot.slane %v877, %v954
      %v956 = vlaneseq
      %v957 = vshrl.u32 %v956, 7
      %v958 = vsub.s32 0, %v957
      %v959 = vrot.slane %v879, %v958
      %v960 = vlaneseq
      %v961 = vshrl.u32 %v960, 7
      %v962 = vsub.s32 0, %v961
      %v963 = vrot.slane %v948, %v962
      %v964 = vlaneseq
      %v965 = vshrl.u32 %v964, 7
      %v966 = vsub.s32 0, %v965
      %v967 = vrot.slane %v950, %v966
      %v968 = vmul.f32 %v730, %v955
      %v969 = vmul.f32 %v732, %v959
      %v970 = vmul.f32 %v783, %v963
      %v971 = vmul.f32 %v785, %v967
      %v972 = vmul.f32 %v734, %v955
      %v973 = vmul.f32 %v736, %v959
      %v974 = vmul.f32 %v787, %v963
      %v975 = vmul.f32 %v789, %v967
      %v976 = vmul.f32 %v740, %v955
      %v977 = vmul.f32 %v742, %v959
      %v978 = vmul.f32 %v793, %v963
      %v979 = vmul.f32 %v795, %v967
      %v980 = vmul.f32 %v744, %v955
      %v981 = vmul.f32 %v746, %v959
      %v982 = vmul.f32 %v797, %v963
      %v983 = vmul.f32 %v799, %v967
      %985 = vset.pattern.permute.xlu0 0
      %986 = vperm.xlu0 %985, %v802
      %v987 = vpop.permute.xlu0 %986
      %990 = vset.pattern.permute.xlu0 0
      %991 = vperm.xlu0 %990, %v803
      %v992 = vpop.permute.xlu0 %991
      %995 = vset.pattern.permute.xlu0 0
      %996 = vperm.xlu0 %995, %v804
      %v997 = vpop.permute.xlu0 %996
      %1000 = vset.pattern.permute.xlu0 0
      %1001 = vperm.xlu0 %1000, %v805
      %v1002 = vpop.permute.xlu0 %1001
      %v1004 = vadd.f32 %v968, %v987
      %v1005 = vadd.f32 %v969, %v987
      %v1006 = vadd.f32 %v970, %v987
      %v1007 = vadd.f32 %v971, %v987
      %v1008 = vadd.f32 %v972, %v992
      %v1009 = vadd.f32 %v973, %v992
      %v1010 = vadd.f32 %v974, %v992
      %v1011 = vadd.f32 %v975, %v992
      %v1012 = vadd.f32 %v976, %v997
      %v1013 = vadd.f32 %v977, %v997
      %v1014 = vadd.f32 %v978, %v997
      %v1015 = vadd.f32 %v979, %v997
      %v1016 = vadd.f32 %v980, %v1002
      %v1017 = vadd.f32 %v981, %v1002
      %v1018 = vadd.f32 %v982, %v1002
      %v1019 = vadd.f32 %v983, %v1002
      %v1020 = vadd.f32 %v1004, %v730
      %v1021 = vadd.f32 %v1005, %v732
      %v1022 = vadd.f32 %v1006, %v783
      %v1023 = vadd.f32 %v1007, %v785
      %v1024 = vadd.f32 %v1008, %v734
      %v1025 = vadd.f32 %v1009, %v736
      %v1026 = vadd.f32 %v1010, %v787
      %v1027 = vadd.f32 %v1011, %v789
      %v1028 = vadd.f32 %v1012, %v740
      %v1029 = vadd.f32 %v1013, %v742
      %v1030 = vadd.f32 %v1014, %v793
      %v1031 = vadd.f32 %v1015, %v795
      %v1032 = vadd.f32 %v1016, %v744
      %v1033 = vadd.f32 %v1017, %v746
      %v1034 = vadd.f32 %v1018, %v797
      %v1035 = vadd.f32 %v1019, %v799
      %1036 = vmatprep.subr.mxu0 %v1021
      %1037 = vmatpush1.msra.mxu0 %v1020
      %1038 = vmatprep.subr.mxu0 %v1025
      %1039 = vmatpush1.msra.mxu0 %v1024
      %1040 = vmatprep.subr.mxu0 %v1029
      %1041 = vmatpush1.msra.mxu0 %v1028
      %1042 = vmatprep.subr.mxu0 %v1033
      %1043 = vmatpush1.msra.mxu0 %v1032
      %1044 = vmatprep.subr.mxu0 0.0
      %1045 = vmatpush1.msra.mxu0 0.0
      %1046 = vmatprep.subr.mxu0 0.0
      %1047 = vmatpush1.msra.mxu0 0.0
      %1048 = vmatprep.subr.mxu0 0.0
      %1049 = vmatpush1.msra.mxu0 0.0
      %1050 = vmatprep.subr.mxu0 0.0
      %1051 = vmatpush1.msra.mxu0 0.0
      %1052 = vmatprep.subr.mxu0 0.0
      %1053 = vmatpush1.msra.mxu0 0.0
      %1054 = vmatprep.subr.mxu0 0.0
      %1055 = vmatpush1.msra.mxu0 0.0
      %1056 = vmatprep.subr.mxu0 0.0
      %1057 = vmatpush1.msra.mxu0 0.0
      %1058 = vmatprep.subr.mxu0 0.0
      %1059 = vmatpush1.msra.mxu0 0.0
      %1060 = vmatprep.subr.mxu0 0.0
      %1061 = vmatpush1.msra.mxu0 0.0
      %1062 = vmatprep.subr.mxu0 0.0
      %1063 = vmatpush1.msra.mxu0 0.0
      %1064 = vmatprep.subr.mxu0 0.0
      %1065 = vmatpush1.msra.mxu0 0.0
      %1066 = vmatprep.subr.mxu0 0.0
      %1067 = vmatpush1.msra.mxu0 0.0
      %1068 = vmatprep.subr.mxu0 0.0
      %1069 = vmatpush1.msra.mxu0 0.0
      %1070 = vmatprep.subr.mxu0 0.0
      %1071 = vmatpush1.msra.mxu0 0.0
      %1072 = vmatprep.subr.mxu0 0.0
      %1073 = vmatpush1.msra.mxu0 0.0
      %1074 = vmatprep.subr.mxu0 0.0
      %1075 = vmatpush1.msra.mxu0 0.0
      %1076 = vmatprep.subr.mxu0 0.0
      %1077 = vmatpush1.msra.mxu0 0.0
      %1078 = vmatprep.subr.mxu0 0.0
      %1079 = vmatpush1.msra.mxu0 0.0
      %1080 = vmatprep.subr.mxu0 0.0
      %1081 = vmatpush1.msra.mxu0 0.0
      %1082 = vmatprep.subr.mxu0 0.0
      %1083 = vmatpush1.msra.mxu0 0.0
      %1084 = vmatprep.subr.mxu0 0.0
      %1085 = vmatpush1.msra.mxu0 0.0
      %1086 = vmatprep.subr.mxu0 0.0
      %1087 = vmatpush1.msra.mxu0 0.0
      %1088 = vmatprep.subr.mxu0 0.0
      %1089 = vmatpush1.msra.mxu0 0.0
      %1090 = vmatprep.subr.mxu0 0.0
      %1091 = vmatpush1.msra.mxu0 0.0
      %1092 = vmatprep.subr.mxu0 0.0
      %1093 = vmatpush1.msra.mxu0 0.0
      %1094 = vmatprep.subr.mxu0 0.0
      %1095 = vmatpush1.msra.mxu0 0.0
      %1096 = vmatprep.subr.mxu0 0.0
      %1097 = vmatpush1.msra.mxu0 0.0
      %1098 = vmatprep.subr.mxu0 0.0
      %1099 = vmatpush1.msra.mxu0 0.0
      %1100 = vmatprep.mubr.f32.mxu0 0.0
      %1101 = vmatmul.mubr.f32.gmra.mrb[0].mxu0 %v808
      %v1102 = vpop.f32.mrb[0].mxu0
      %v1103 = vadd.f32 0.0, %v1102
      %v1104 = vpop.f32.mrb[0].mxu0
      %v1105 = vadd.f32 0.0, %v1104
      %1106 = vdwg.mxu0
      %1107 = vmatprep.subr.mxu0 %v1023
      %1108 = vmatpush1.msra.mxu0 %v1022
      %1109 = vmatprep.subr.mxu0 %v1027
      %1110 = vmatpush1.msra.mxu0 %v1026
      %1111 = vmatprep.subr.mxu0 %v1031
      %1112 = vmatpush1.msra.mxu0 %v1030
      %1113 = vmatprep.subr.mxu0 %v1035
      %1114 = vmatpush1.msra.mxu0 %v1034
      %1115 = vmatprep.subr.mxu0 0.0
      %1116 = vmatpush1.msra.mxu0 0.0
      %1117 = vmatprep.subr.mxu0 0.0
      %1118 = vmatpush1.msra.mxu0 0.0
      %1119 = vmatprep.subr.mxu0 0.0
      %1120 = vmatpush1.msra.mxu0 0.0
      %1121 = vmatprep.subr.mxu0 0.0
      %1122 = vmatpush1.msra.mxu0 0.0
      %1123 = vmatprep.subr.mxu0 0.0
      %1124 = vmatpush1.msra.mxu0 0.0
      %1125 = vmatprep.subr.mxu0 0.0
      %1126 = vmatpush1.msra.mxu0 0.0
      %1127 = vmatprep.subr.mxu0 0.0
      %1128 = vmatpush1.msra.mxu0 0.0
      %1129 = vmatprep.subr.mxu0 0.0
      %1130 = vmatpush1.msra.mxu0 0.0
      %1131 = vmatprep.subr.mxu0 0.0
      %1132 = vmatpush1.msra.mxu0 0.0
      %1133 = vmatprep.subr.mxu0 0.0
      %1134 = vmatpush1.msra.mxu0 0.0
      %1135 = vmatprep.subr.mxu0 0.0
      %1136 = vmatpush1.msra.mxu0 0.0
      %1137 = vmatprep.subr.mxu0 0.0
      %1138 = vmatpush1.msra.mxu0 0.0
      %1139 = vmatprep.subr.mxu0 0.0
      %1140 = vmatpush1.msra.mxu0 0.0
      %1141 = vmatprep.subr.mxu0 0.0
      %1142 = vmatpush1.msra.mxu0 0.0
      %1143 = vmatprep.subr.mxu0 0.0
      %1144 = vmatpush1.msra.mxu0 0.0
      %1145 = vmatprep.subr.mxu0 0.0
      %1146 = vmatpush1.msra.mxu0 0.0
      %1147 = vmatprep.subr.mxu0 0.0
      %1148 = vmatpush1.msra.mxu0 0.0
      %1149 = vmatprep.subr.mxu0 0.0
      %1150 = vmatpush1.msra.mxu0 0.0
      %1151 = vmatprep.subr.mxu0 0.0
      %1152 = vmatpush1.msra.mxu0 0.0
      %1153 = vmatprep.subr.mxu0 0.0
      %1154 = vmatpush1.msra.mxu0 0.0
      %1155 = vmatprep.subr.mxu0 0.0
      %1156 = vmatpush1.msra.mxu0 0.0
      %1157 = vmatprep.subr.mxu0 0.0
      %1158 = vmatpush1.msra.mxu0 0.0
      %1159 = vmatprep.subr.mxu0 0.0
      %1160 = vmatpush1.msra.mxu0 0.0
      %1161 = vmatprep.subr.mxu0 0.0
      %1162 = vmatpush1.msra.mxu0 0.0
      %1163 = vmatprep.subr.mxu0 0.0
      %1164 = vmatpush1.msra.mxu0 0.0
      %1165 = vmatprep.subr.mxu0 0.0
      %1166 = vmatpush1.msra.mxu0 0.0
      %1167 = vmatprep.subr.mxu0 0.0
      %1168 = vmatpush1.msra.mxu0 0.0
      %1169 = vmatprep.subr.mxu0 0.0
      %1170 = vmatpush1.msra.mxu0 0.0
      %1171 = vmatprep.mubr.f32.mxu0 0.0
      %1172 = vmatmul.mubr.f32.gmra.mrb[0].mxu0 %v808
      %v1173 = vpop.f32.mrb[0].mxu0
      %v1174 = vadd.f32 0.0, %v1173
      %v1175 = vpop.f32.mrb[0].mxu0
      %v1176 = vadd.f32 0.0, %v1175
      %1177 = vdwg.mxu0
      %v1178 = vlaneseq
      %v1179 = vshrl.u32 %v1178, 7
      %v1180 = vsub.s32 1, %v1179
      %v1181 = vrot.slane %v1103, %v1180
      %v1182 = vlaneseq
      %v1183 = vshrl.u32 %v1182, 7
      %v1184 = vsub.s32 1, %v1183
      %v1185 = vrot.slane %v1105, %v1184
      %v1186 = vlaneseq
      %v1187 = vshrl.u32 %v1186, 7
      %v1188 = vsub.s32 1, %v1187
      %v1189 = vrot.slane %v1174, %v1188
      %v1190 = vlaneseq
      %v1191 = vshrl.u32 %v1190, 7
      %v1192 = vsub.s32 1, %v1191
      %v1193 = vrot.slane %v1176, %v1192
      %v1194 = vmul.f32 %v730, %v1181
      %v1195 = vmul.f32 %v732, %v1185
      %v1196 = vmul.f32 %v783, %v1189
      %v1197 = vmul.f32 %v785, %v1193
      %v1198 = vmul.f32 %v734, %v1181
      %v1199 = vmul.f32 %v736, %v1185
      %v1200 = vmul.f32 %v787, %v1189
      %v1201 = vmul.f32 %v789, %v1193
      %v1202 = vmul.f32 %v740, %v1181
      %v1203 = vmul.f32 %v742, %v1185
      %v1204 = vmul.f32 %v793, %v1189
      %v1205 = vmul.f32 %v795, %v1193
      %v1206 = vmul.f32 %v744, %v1181
      %v1207 = vmul.f32 %v746, %v1185
      %v1208 = vmul.f32 %v797, %v1189
      %v1209 = vmul.f32 %v799, %v1193
      %1210 = vset.pattern.permute.xlu0 1
      %1211 = vperm.xlu0 %1210, %v802
      %v1212 = vpop.permute.xlu0 %1211
      %1214 = vset.pattern.permute.xlu0 1
      %1215 = vperm.xlu0 %1214, %v803
      %v1216 = vpop.permute.xlu0 %1215
      %1218 = vset.pattern.permute.xlu0 1
      %1219 = vperm.xlu0 %1218, %v804
      %v1220 = vpop.permute.xlu0 %1219
      %1222 = vset.pattern.permute.xlu0 1
      %1223 = vperm.xlu0 %1222, %v805
      %v1224 = vpop.permute.xlu0 %1223
      %v1226 = vadd.f32 %v1194, %v1212
      %v1227 = vadd.f32 %v1195, %v1212
      %v1228 = vadd.f32 %v1196, %v1212
      %v1229 = vadd.f32 %v1197, %v1212
      %v1230 = vadd.f32 %v1198, %v1216
      %v1231 = vadd.f32 %v1199, %v1216
      %v1232 = vadd.f32 %v1200, %v1216
      %v1233 = vadd.f32 %v1201, %v1216
      %v1234 = vadd.f32 %v1202, %v1220
      %v1235 = vadd.f32 %v1203, %v1220
      %v1236 = vadd.f32 %v1204, %v1220
      %v1237 = vadd.f32 %v1205, %v1220
      %v1238 = vadd.f32 %v1206, %v1224
      %v1239 = vadd.f32 %v1207, %v1224
      %v1240 = vadd.f32 %v1208, %v1224
      %v1241 = vadd.f32 %v1209, %v1224
      %v1242 = vadd.f32 %v1226, %v1020
      %v1243 = vadd.f32 %v1227, %v1021
      %v1244 = vadd.f32 %v1228, %v1022
      %v1245 = vadd.f32 %v1229, %v1023
      %v1246 = vadd.f32 %v1230, %v1024
      %v1247 = vadd.f32 %v1231, %v1025
      %v1248 = vadd.f32 %v1232, %v1026
      %v1249 = vadd.f32 %v1233, %v1027
      %v1250 = vadd.f32 %v1234, %v1028
      %v1251 = vadd.f32 %v1235, %v1029
      %v1252 = vadd.f32 %v1236, %v1030
      %v1253 = vadd.f32 %v1237, %v1031
      %v1254 = vadd.f32 %v1238, %v1032
      %v1255 = vadd.f32 %v1239, %v1033
      %v1256 = vadd.f32 %v1240, %v1034
      %v1257 = vadd.f32 %v1241, %v1035
      %1258 = vmatprep.subr.mxu0 %v1243
      %1259 = vmatpush1.msra.mxu0 %v1242
      %1260 = vmatprep.subr.mxu0 %v1247
      %1261 = vmatpush1.msra.mxu0 %v1246
      %1262 = vmatprep.subr.mxu0 %v1251
      %1263 = vmatpush1.msra.mxu0 %v1250
      %1264 = vmatprep.subr.mxu0 %v1255
      %1265 = vmatpush1.msra.mxu0 %v1254
      %1266 = vmatprep.subr.mxu0 0.0
      %1267 = vmatpush1.msra.mxu0 0.0
      %1268 = vmatprep.subr.mxu0 0.0
      %1269 = vmatpush1.msra.mxu0 0.0
      %1270 = vmatprep.subr.mxu0 0.0
      %1271 = vmatpush1.msra.mxu0 0.0
      %1272 = vmatprep.subr.mxu0 0.0
      %1273 = vmatpush1.msra.mxu0 0.0
      %1274 = vmatprep.subr.mxu0 0.0
      %1275 = vmatpush1.msra.mxu0 0.0
      %1276 = vmatprep.subr.mxu0 0.0
      %1277 = vmatpush1.msra.mxu0 0.0
      %1278 = vmatprep.subr.mxu0 0.0
      %1279 = vmatpush1.msra.mxu0 0.0
      %1280 = vmatprep.subr.mxu0 0.0
      %1281 = vmatpush1.msra.mxu0 0.0
      %1282 = vmatprep.subr.mxu0 0.0
      %1283 = vmatpush1.msra.mxu0 0.0
      %1284 = vmatprep.subr.mxu0 0.0
      %1285 = vmatpush1.msra.mxu0 0.0
      %1286 = vmatprep.subr.mxu0 0.0
      %1287 = vmatpush1.msra.mxu0 0.0
      %1288 = vmatprep.subr.mxu0 0.0
      %1289 = vmatpush1.msra.mxu0 0.0
      %1290 = vmatprep.subr.mxu0 0.0
      %1291 = vmatpush1.msra.mxu0 0.0
      %1292 = vmatprep.subr.mxu0 0.0
      %1293 = vmatpush1.msra.mxu0 0.0
      %1294 = vmatprep.subr.mxu0 0.0
      %1295 = vmatpush1.msra.mxu0 0.0
      %1296 = vmatprep.subr.mxu0 0.0
      %1297 = vmatpush1.msra.mxu0 0.0
      %1298 = vmatprep.subr.mxu0 0.0
      %1299 = vmatpush1.msra.mxu0 0.0
      %1300 = vmatprep.subr.mxu0 0.0
      %1301 = vmatpush1.msra.mxu0 0.0
      %1302 = vmatprep.subr.mxu0 0.0
      %1303 = vmatpush1.msra.mxu0 0.0
      %1304 = vmatprep.subr.mxu0 0.0
      %1305 = vmatpush1.msra.mxu0 0.0
      %1306 = vmatprep.subr.mxu0 0.0
      %1307 = vmatpush1.msra.mxu0 0.0
      %1308 = vmatprep.subr.mxu0 0.0
      %1309 = vmatpush1.msra.mxu0 0.0
      %1310 = vmatprep.subr.mxu0 0.0
      %1311 = vmatpush1.msra.mxu0 0.0
      %1312 = vmatprep.subr.mxu0 0.0
      %1313 = vmatpush1.msra.mxu0 0.0
      %1314 = vmatprep.subr.mxu0 0.0
      %1315 = vmatpush1.msra.mxu0 0.0
      %1316 = vmatprep.subr.mxu0 0.0
      %1317 = vmatpush1.msra.mxu0 0.0
      %1318 = vmatprep.subr.mxu0 0.0
      %1319 = vmatpush1.msra.mxu0 0.0
      %1320 = vmatprep.subr.mxu0 0.0
      %1321 = vmatpush1.msra.mxu0 0.0
      %1322 = vmatprep.mubr.f32.mxu0 0.0
      %1323 = vmatmul.mubr.f32.gmra.mrb[0].mxu0 %v808
      %v1324 = vpop.f32.mrb[0].mxu0
      %v1325 = vadd.f32 0.0, %v1324
      %v1326 = vpop.f32.mrb[0].mxu0
      %v1327 = vadd.f32 0.0, %v1326
      %1328 = vdwg.mxu0
      %1329 = vmatprep.subr.mxu0 %v1245
      %1330 = vmatpush1.msra.mxu0 %v1244
      %1331 = vmatprep.subr.mxu0 %v1249
      %1332 = vmatpush1.msra.mxu0 %v1248
      %1333 = vmatprep.subr.mxu0 %v1253
      %1334 = vmatpush1.msra.mxu0 %v1252
      %1335 = vmatprep.subr.mxu0 %v1257
      %1336 = vmatpush1.msra.mxu0 %v1256
      %1337 = vmatprep.subr.mxu0 0.0
      %1338 = vmatpush1.msra.mxu0 0.0
      %1339 = vmatprep.subr.mxu0 0.0
      %1340 = vmatpush1.msra.mxu0 0.0
      %1341 = vmatprep.subr.mxu0 0.0
      %1342 = vmatpush1.msra.mxu0 0.0
      %1343 = vmatprep.subr.mxu0 0.0
      %1344 = vmatpush1.msra.mxu0 0.0
      %1345 = vmatprep.subr.mxu0 0.0
      %1346 = vmatpush1.msra.mxu0 0.0
      %1347 = vmatprep.subr.mxu0 0.0
      %1348 = vmatpush1.msra.mxu0 0.0
      %1349 = vmatprep.subr.mxu0 0.0
      %1350 = vmatpush1.msra.mxu0 0.0
      %1351 = vmatprep.subr.mxu0 0.0
      %1352 = vmatpush1.msra.mxu0 0.0
      %1353 = vmatprep.subr.mxu0 0.0
      %1354 = vmatpush1.msra.mxu0 0.0
      %1355 = vmatprep.subr.mxu0 0.0
      %1356 = vmatpush1.msra.mxu0 0.0
      %1357 = vmatprep.subr.mxu0 0.0
      %1358 = vmatpush1.msra.mxu0 0.0
      %1359 = vmatprep.subr.mxu0 0.0
      %1360 = vmatpush1.msra.mxu0 0.0
      %1361 = vmatprep.subr.mxu0 0.0
      %1362 = vmatpush1.msra.mxu0 0.0
      %1363 = vmatprep.subr.mxu0 0.0
      %1364 = vmatpush1.msra.mxu0 0.0
      %1365 = vmatprep.subr.mxu0 0.0
      %1366 = vmatpush1.msra.mxu0 0.0
      %1367 = vmatprep.subr.mxu0 0.0
      %1368 = vmatpush1.msra.mxu0 0.0
      %1369 = vmatprep.subr.mxu0 0.0
      %1370 = vmatpush1.msra.mxu0 0.0
      %1371 = vmatprep.subr.mxu0 0.0
      %1372 = vmatpush1.msra.mxu0 0.0
      %1373 = vmatprep.subr.mxu0 0.0
      %1374 = vmatpush1.msra.mxu0 0.0
      %1375 = vmatprep.subr.mxu0 0.0
      %1376 = vmatpush1.msra.mxu0 0.0
      %1377 = vmatprep.subr.mxu0 0.0
      %1378 = vmatpush1.msra.mxu0 0.0
      %1379 = vmatprep.subr.mxu0 0.0
      %1380 = vmatpush1.msra.mxu0 0.0
      %1381 = vmatprep.subr.mxu0 0.0
      %1382 = vmatpush1.msra.mxu0 0.0
      %1383 = vmatprep.subr.mxu0 0.0
      %1384 = vmatpush1.msra.mxu0 0.0
      %1385 = vmatprep.subr.mxu0 0.0
      %1386 = vmatpush1.msra.mxu0 0.0
      %1387 = vmatprep.subr.mxu0 0.0
      %1388 = vmatpush1.msra.mxu0 0.0
      %1389 = vmatprep.subr.mxu0 0.0
      %1390 = vmatpush1.msra.mxu0 0.0
      %1391 = vmatprep.subr.mxu0 0.0
      %1392 = vmatpush1.msra.mxu0 0.0
      %1393 = vmatprep.mubr.f32.mxu0 0.0
      %1394 = vmatmul.mubr.f32.gmra.mrb[0].mxu0 %v808
      %v1395 = vpop.f32.mrb[0].mxu0
      %v1396 = vadd.f32 0.0, %v1395
      %v1397 = vpop.f32.mrb[0].mxu0
      %v1398 = vadd.f32 0.0, %v1397
      %1399 = vdwg.mxu0
      %v1400 = vlaneseq
      %v1401 = vshrl.u32 %v1400, 7
      %v1402 = vsub.s32 2, %v1401
      %v1403 = vrot.slane %v1325, %v1402
      %v1404 = vlaneseq
      %v1405 = vshrl.u32 %v1404, 7
      %v1406 = vsub.s32 2, %v1405
      %v1407 = vrot.slane %v1327, %v1406
      %v1408 = vlaneseq
      %v1409 = vshrl.u32 %v1408, 7
      %v1410 = vsub.s32 2, %v1409
      %v1411 = vrot.slane %v1396, %v1410
      %v1412 = vlaneseq
      %v1413 = vshrl.u32 %v1412, 7
      %v1414 = vsub.s32 2, %v1413
      %v1415 = vrot.slane %v1398, %v1414
      %v1416 = vmul.f32 %v730, %v1403
      %v1417 = vmul.f32 %v732, %v1407
      %v1418 = vmul.f32 %v783, %v1411
      %v1419 = vmul.f32 %v785, %v1415
      %v1420 = vmul.f32 %v734, %v1403
      %v1421 = vmul.f32 %v736, %v1407
      %v1422 = vmul.f32 %v787, %v1411
      %v1423 = vmul.f32 %v789, %v1415
      %v1424 = vmul.f32 %v740, %v1403
      %v1425 = vmul.f32 %v742, %v1407
      %v1426 = vmul.f32 %v793, %v1411
      %v1427 = vmul.f32 %v795, %v1415
      %v1428 = vmul.f32 %v744, %v1403
      %v1429 = vmul.f32 %v746, %v1407
      %v1430 = vmul.f32 %v797, %v1411
      %v1431 = vmul.f32 %v799, %v1415
      %1432 = vset.pattern.permute.xlu0 2
      %1433 = vperm.xlu0 %1432, %v802
      %v1434 = vpop.permute.xlu0 %1433
      %1436 = vset.pattern.permute.xlu0 2
      %1437 = vperm.xlu0 %1436, %v803
      %v1438 = vpop.permute.xlu0 %1437
      %1440 = vset.pattern.permute.xlu0 2
      %1441 = vperm.xlu0 %1440, %v804
      %v1442 = vpop.permute.xlu0 %1441
      %1444 = vset.pattern.permute.xlu0 2
      %1445 = vperm.xlu0 %1444, %v805
      %v1446 = vpop.permute.xlu0 %1445
      %v1448 = vadd.f32 %v1416, %v1434
      %v1449 = vadd.f32 %v1417, %v1434
      %v1450 = vadd.f32 %v1418, %v1434
      %v1451 = vadd.f32 %v1419, %v1434
      %v1452 = vadd.f32 %v1420, %v1438
      %v1453 = vadd.f32 %v1421, %v1438
      %v1454 = vadd.f32 %v1422, %v1438
      %v1455 = vadd.f32 %v1423, %v1438
      %v1456 = vadd.f32 %v1424, %v1442
      %v1457 = vadd.f32 %v1425, %v1442
      %v1458 = vadd.f32 %v1426, %v1442
      %v1459 = vadd.f32 %v1427, %v1442
      %v1460 = vadd.f32 %v1428, %v1446
      %v1461 = vadd.f32 %v1429, %v1446
      %v1462 = vadd.f32 %v1430, %v1446
      %v1463 = vadd.f32 %v1431, %v1446
      %v1464 = vadd.f32 %v1448, %v1242
      %v1465 = vadd.f32 %v1449, %v1243
      %v1466 = vadd.f32 %v1450, %v1244
      %v1467 = vadd.f32 %v1451, %v1245
      %v1468 = vadd.f32 %v1452, %v1246
      %v1469 = vadd.f32 %v1453, %v1247
      %v1470 = vadd.f32 %v1454, %v1248
      %v1471 = vadd.f32 %v1455, %v1249
      %v1472 = vadd.f32 %v1456, %v1250
      %v1473 = vadd.f32 %v1457, %v1251
      %v1474 = vadd.f32 %v1458, %v1252
      %v1475 = vadd.f32 %v1459, %v1253
      %v1476 = vadd.f32 %v1460, %v1254
      %v1477 = vadd.f32 %v1461, %v1255
      %v1478 = vadd.f32 %v1462, %v1256
      %v1479 = vadd.f32 %v1463, %v1257
      %v1480 = vld [vmem:[%s7] sm:$0xff]
      %v1481 = vld [vmem:[%s7 + $0x8] sm:$0xff]
      %v1482 = vld [vmem:[%s7 + $0x10] sm:$0xff]
      %v1483 = vld [vmem:[%s7 + $0x18] sm:$0xff]
      %v1484 = vld [vmem:[%s7 + $0x20] sm:$0xff]
      %v1485 = vld [vmem:[%s7 + $0x28] sm:$0xff]
      %v1486 = vld [vmem:[%s7 + $0x30] sm:$0xff]
      %v1487 = vld [vmem:[%s7 + $0x38] sm:$0xff]
      %v1488 = vld [vmem:[%s7 + $0x40] sm:$0xff]
      %v1489 = vld [vmem:[%s7 + $0x48] sm:$0xff]
      %v1490 = vld [vmem:[%s7 + $0x50] sm:$0xff]
      %v1491 = vld [vmem:[%s7 + $0x58] sm:$0xff]
      %v1492 = vld [vmem:[%s5] sm:$0xf]
      %v1493 = vld [vmem:[%s5 + $0x4] sm:$0xf]
      %v1494 = vld [vmem:[%s5 + $0x8] sm:$0xf]
      %v1495 = vld [vmem:[%s5 + $0xc] sm:$0xf]
      %v1496 = vld [vmem:[%s5 + $0x10] sm:$0xf]
      %v1497 = vld [vmem:[%s5 + $0x14] sm:$0xf]
      %v1498 = vld [vmem:[%s5 + $0x18] sm:$0xf]
      %v1499 = vld [vmem:[%s5 + $0x1c] sm:$0xf]
      %v1500 = vpack.c.bf16 %v1468, %v1464
      %v1501 = vpack.c.bf16 %v1469, %v1465
      %v1502 = vpack.c.bf16 %v1470, %v1466
      %v1503 = vpack.c.bf16 %v1471, %v1467
      %v1504 = vpack.c.bf16 %v1476, %v1472
      %v1505 = vpack.c.bf16 %v1477, %v1473
      %v1506 = vpack.c.bf16 %v1478, %v1474
      %v1507 = vpack.c.bf16 %v1479, %v1475
      %1509 = vset.pattern.permute.xlu0 0
      %1510 = vperm.xlu0 %1509, %v1480
      %v1511 = vpop.permute.xlu0 %1510
      %1514 = vset.pattern.permute.xlu0 0
      %1515 = vperm.xlu0 %1514, %v1481
      %v1516 = vpop.permute.xlu0 %1515
      %1519 = vset.pattern.permute.xlu0 0
      %1520 = vperm.xlu0 %1519, %v1482
      %v1521 = vpop.permute.xlu0 %1520
      %1524 = vset.pattern.permute.xlu0 0
      %1525 = vperm.xlu0 %1524, %v1483
      %v1526 = vpop.permute.xlu0 %1525
      %1529 = vset.pattern.permute.xlu0 0
      %1530 = vperm.xlu0 %1529, %v1484
      %v1531 = vpop.permute.xlu0 %1530
      %1534 = vset.pattern.permute.xlu0 0
      %1535 = vperm.xlu0 %1534, %v1485
      %v1536 = vpop.permute.xlu0 %1535
      %1539 = vset.pattern.permute.xlu0 0
      %1540 = vperm.xlu0 %1539, %v1486
      %v1541 = vpop.permute.xlu0 %1540
      %1544 = vset.pattern.permute.xlu0 0
      %1545 = vperm.xlu0 %1544, %v1487
      %v1546 = vpop.permute.xlu0 %1545
      %v1556 = vunpack.c.l.b16 %v1492
      %v1557 = vunpack.c.l.b16 %v1493
      %v1558 = vunpack.c.l.b16 %v1494
      %v1559 = vunpack.c.l.b16 %v1495
      %v1560 = vunpack.c.l.b16 %v1496
      %v1561 = vunpack.c.l.b16 %v1497
      %v1562 = vunpack.c.l.b16 %v1498
      %v1563 = vunpack.c.l.b16 %v1499
      %v1564 = vpack.c.b16 %v1557, %v1556
      %v1565 = vpack.c.b16 %v1559, %v1558
      %v1566 = vpack.c.b16 %v1561, %v1560
      %v1567 = vpack.c.b16 %v1563, %v1562
      %v1569 = vsel %vm806, %v1564, 0
      %v1572 = vsel %vm806, %v1565, 0
      %v1575 = vsel %vm806, %v1566, 0
      %v1578 = vsel %vm806, %v1567, 0
      %1580 = vmatprep.subr.bf16.mxu0 %v1501
      %1581 = vmatpush1.bf16.msra.mxu0 %v1500
      %1582 = vmatprep.subr.bf16.mxu0 %v1505
      %1583 = vmatpush1.bf16.msra.mxu0 %v1504
      %1584 = vmatprep.subr.bf16.mxu0 0
      %1585 = vmatpush1.bf16.msra.mxu0 0
      %1586 = vmatprep.subr.bf16.mxu0 0
      %1587 = vmatpush1.bf16.msra.mxu0 0
      %1588 = vmatprep.subr.bf16.mxu0 0
      %1589 = vmatpush1.bf16.msra.mxu0 0
      %1590 = vmatprep.subr.bf16.mxu0 0
      %1591 = vmatpush1.bf16.msra.mxu0 0
      %1592 = vmatprep.subr.bf16.mxu0 0
      %1593 = vmatpush1.bf16.msra.mxu0 0
      %1594 = vmatprep.subr.bf16.mxu0 0
      %1595 = vmatpush1.bf16.msra.mxu0 0
      %1596 = vmatprep.subr.bf16.mxu0 0
      %1597 = vmatpush1.bf16.msra.mxu0 0
      %1598 = vmatprep.subr.bf16.mxu0 0
      %1599 = vmatpush1.bf16.msra.mxu0 0
      %1600 = vmatprep.subr.bf16.mxu0 0
      %1601 = vmatpush1.bf16.msra.mxu0 0
      %1602 = vmatprep.subr.bf16.mxu0 0
      %1603 = vmatpush1.bf16.msra.mxu0 0
      %1604 = vmatprep.subr.bf16.mxu0 0
      %1605 = vmatpush1.bf16.msra.mxu0 0
      %1606 = vmatprep.subr.bf16.mxu0 0
      %1607 = vmatpush1.bf16.msra.mxu0 0
      %1608 = vmatprep.subr.bf16.mxu0 0
      %1609 = vmatpush1.bf16.msra.mxu0 0
      %1610 = vmatprep.subr.bf16.mxu0 0
      %1611 = vmatpush1.bf16.msra.mxu0 0
      %1612 = vmatprep.mubr.bf16.mxu0 0
      %1613 = vmatmul.mubr.bf16.gmra.mrb[0].mxu0 %v1569
      %v1614 = vpop.f32.mrb[0].mxu0
      %v1615 = vadd.f32 %v1511, %v1614
      %v1616 = vpop.f32.mrb[0].mxu0
      %v1617 = vadd.f32 %v1511, %v1616
      %v1618 = vpop.f32.mrb[0].mxu0
      %v1619 = vadd.f32 %v1516, %v1618
      %v1620 = vpop.f32.mrb[0].mxu0
      %v1621 = vadd.f32 %v1516, %v1620
      %1622 = vmatprep.mubr.bf16.mxu0 0
      %1623 = vmatmul.mubr.bf16.gmra.mrb[0].mxu0 %v1572
      %v1624 = vpop.f32.mrb[0].mxu0
      %v1625 = vadd.f32 %v1521, %v1624
      %v1626 = vpop.f32.mrb[0].mxu0
      %v1627 = vadd.f32 %v1521, %v1626
      %v1628 = vpop.f32.mrb[0].mxu0
      %v1629 = vadd.f32 %v1526, %v1628
      %v1630 = vpop.f32.mrb[0].mxu0
      %v1631 = vadd.f32 %v1526, %v1630
      %1632 = vmatprep.mubr.bf16.mxu0 0
      %1633 = vmatmul.mubr.bf16.gmra.mrb[0].mxu0 %v1575
      %v1634 = vpop.f32.mrb[0].mxu0
      %v1635 = vadd.f32 %v1531, %v1634
      %v1636 = vpop.f32.mrb[0].mxu0
      %v1637 = vadd.f32 %v1531, %v1636
      %v1638 = vpop.f32.mrb[0].mxu0
      %v1639 = vadd.f32 %v1536, %v1638
      %v1640 = vpop.f32.mrb[0].mxu0
      %v1641 = vadd.f32 %v1536, %v1640
      %1642 = vmatprep.mubr.bf16.mxu0 0
      %1643 = vmatmul.mubr.bf16.gmra.mrb[0].mxu0 %v1578
      %v1644 = vpop.f32.mrb[0].mxu0
      %v1645 = vadd.f32 %v1541, %v1644
      %v1646 = vpop.f32.mrb[0].mxu0
      %v1647 = vadd.f32 %v1541, %v1646
      %v1648 = vpop.f32.mrb[0].mxu0
      %v1649 = vadd.f32 %v1546, %v1648
      %v1650 = vpop.f32.mrb[0].mxu0
      %v1651 = vadd.f32 %v1546, %v1650
      %1652 = vdwg.mxu0
      %1653 = vmatprep.subr.bf16.mxu0 %v1503
      %1654 = vmatpush1.bf16.msra.mxu0 %v1502
      %1655 = vmatprep.subr.bf16.mxu0 %v1507
      %1656 = vmatpush1.bf16.msra.mxu0 %v1506
      %1657 = vmatprep.subr.bf16.mxu0 0
      %1658 = vmatpush1.bf16.msra.mxu0 0
      %1659 = vmatprep.subr.bf16.mxu0 0
      %1660 = vmatpush1.bf16.msra.mxu0 0
      %1661 = vmatprep.subr.bf16.mxu0 0
      %1662 = vmatpush1.bf16.msra.mxu0 0
      %1663 = vmatprep.subr.bf16.mxu0 0
      %1664 = vmatpush1.bf16.msra.mxu0 0
      %1665 = vmatprep.subr.bf16.mxu0 0
      %1666 = vmatpush1.bf16.msra.mxu0 0
      %1667 = vmatprep.subr.bf16.mxu0 0
      %1668 = vmatpush1.bf16.msra.mxu0 0
      %1669 = vmatprep.subr.bf16.mxu0 0
      %1670 = vmatpush1.bf16.msra.mxu0 0
      %1671 = vmatprep.subr.bf16.mxu0 0
      %1672 = vmatpush1.bf16.msra.mxu0 0
      %1673 = vmatprep.subr.bf16.mxu0 0
      %1674 = vmatpush1.bf16.msra.mxu0 0
      %1675 = vmatprep.subr.bf16.mxu0 0
      %1676 = vmatpush1.bf16.msra.mxu0 0
      %1677 = vmatprep.subr.bf16.mxu0 0
      %1678 = vmatpush1.bf16.msra.mxu0 0
      %1679 = vmatprep.subr.bf16.mxu0 0
      %1680 = vmatpush1.bf16.msra.mxu0 0
      %1681 = vmatprep.subr.bf16.mxu0 0
      %1682 = vmatpush1.bf16.msra.mxu0 0
      %1683 = vmatprep.subr.bf16.mxu0 0
      %1684 = vmatpush1.bf16.msra.mxu0 0
      %1685 = vmatprep.mubr.bf16.mxu0 0
      %1686 = vmatmul.mubr.bf16.gmra.mrb[0].mxu0 %v1569
      %v1687 = vpop.f32.mrb[0].mxu0
      %v1688 = vadd.f32 %v1511, %v1687
      %v1689 = vpop.f32.mrb[0].mxu0
      %v1690 = vadd.f32 %v1511, %v1689
      %v1691 = vpop.f32.mrb[0].mxu0
      %v1692 = vadd.f32 %v1516, %v1691
      %v1693 = vpop.f32.mrb[0].mxu0
      %v1694 = vadd.f32 %v1516, %v1693
      %1695 = vmatprep.mubr.bf16.mxu0 0
      %1696 = vmatmul.mubr.bf16.gmra.mrb[0].mxu0 %v1572
      %v1697 = vpop.f32.mrb[0].mxu0
      %v1698 = vadd.f32 %v1521, %v1697
      %v1699 = vpop.f32.mrb[0].mxu0
      %v1700 = vadd.f32 %v1521, %v1699
      %v1701 = vpop.f32.mrb[0].mxu0
      %v1702 = vadd.f32 %v1526, %v1701
      %v1703 = vpop.f32.mrb[0].mxu0
      %v1704 = vadd.f32 %v1526, %v1703
      %1705 = vmatprep.mubr.bf16.mxu0 0
      %1706 = vmatmul.mubr.bf16.gmra.mrb[0].mxu0 %v1575
      %v1707 = vpop.f32.mrb[0].mxu0
      %v1708 = vadd.f32 %v1531, %v1707
      %v1709 = vpop.f32.mrb[0].mxu0
      %v1710 = vadd.f32 %v1531, %v1709
      %v1711 = vpop.f32.mrb[0].mxu0
      %v1712 = vadd.f32 %v1536, %v1711
      %v1713 = vpop.f32.mrb[0].mxu0
      %v1714 = vadd.f32 %v1536, %v1713
      %1715 = vmatprep.mubr.bf16.mxu0 0
      %1716 = vmatmul.mubr.bf16.gmra.mrb[0].mxu0 %v1578
      %v1717 = vpop.f32.mrb[0].mxu0
      %v1718 = vadd.f32 %v1541, %v1717
      %v1719 = vpop.f32.mrb[0].mxu0
      %v1720 = vadd.f32 %v1541, %v1719
      %v1721 = vpop.f32.mrb[0].mxu0
      %v1722 = vadd.f32 %v1546, %v1721
      %v1723 = vpop.f32.mrb[0].mxu0
      %v1724 = vadd.f32 %v1546, %v1723
      %1725 = vdwg.mxu0
      %v1726 = vmax.f32 %v1615, 0.0
      %v1727 = vmax.f32 %v1617, 0.0
      %v1728 = vmax.f32 %v1688, 0.0
      %v1729 = vmax.f32 %v1690, 0.0
      %v1730 = vmax.f32 %v1619, 0.0
      %v1731 = vmax.f32 %v1621, 0.0
      %v1732 = vmax.f32 %v1692, 0.0
      %v1733 = vmax.f32 %v1694, 0.0
      %v1734 = vmax.f32 %v1625, 0.0
      %v1735 = vmax.f32 %v1627, 0.0
      %v1736 = vmax.f32 %v1698, 0.0
      %v1737 = vmax.f32 %v1700, 0.0
      %v1738 = vmax.f32 %v1629, 0.0
      %v1739 = vmax.f32 %v1631, 0.0
      %v1740 = vmax.f32 %v1702, 0.0
      %v1741 = vmax.f32 %v1704, 0.0
      %v1742 = vmax.f32 %v1635, 0.0
      %v1743 = vmax.f32 %v1637, 0.0
      %v1744 = vmax.f32 %v1708, 0.0
      %v1745 = vmax.f32 %v1710, 0.0
      %v1746 = vmax.f32 %v1639, 0.0
      %v1747 = vmax.f32 %v1641, 0.0
      %v1748 = vmax.f32 %v1712, 0.0
      %v1749 = vmax.f32 %v1714, 0.0
      %v1750 = vmax.f32 %v1645, 0.0
      %v1751 = vmax.f32 %v1647, 0.0
      %v1752 = vmax.f32 %v1718, 0.0
      %v1753 = vmax.f32 %v1720, 0.0
      %v1754 = vmax.f32 %v1649, 0.0
      %v1755 = vmax.f32 %v1651, 0.0
      %v1756 = vmax.f32 %v1722, 0.0
      %v1757 = vmax.f32 %v1724, 0.0
      %v1758 = vld [vmem:[%s6] sm:$0xf]
      %v1759 = vld [vmem:[%s6 + $0x4] sm:$0xf]
      %v1760 = vld [vmem:[%s6 + $0x8] sm:$0xf]
      %v1761 = vld [vmem:[%s6 + $0xc] sm:$0xf]
      %v1762 = vpack.c.bf16 %v1730, %v1726
      %v1763 = vpack.c.bf16 %v1731, %v1727
      %v1764 = vpack.c.bf16 %v1732, %v1728
      %v1765 = vpack.c.bf16 %v1733, %v1729
      %v1766 = vpack.c.bf16 %v1738, %v1734
      %v1767 = vpack.c.bf16 %v1739, %v1735
      %v1768 = vpack.c.bf16 %v1740, %v1736
      %v1769 = vpack.c.bf16 %v1741, %v1737
      %v1770 = vpack.c.bf16 %v1746, %v1742
      %v1771 = vpack.c.bf16 %v1747, %v1743
      %v1772 = vpack.c.bf16 %v1748, %v1744
      %v1773 = vpack.c.bf16 %v1749, %v1745
      %v1774 = vpack.c.bf16 %v1754, %v1750
      %v1775 = vpack.c.bf16 %v1755, %v1751
      %v1776 = vpack.c.bf16 %v1756, %v1752
      %v1777 = vpack.c.bf16 %v1757, %v1753
      %1779 = vset.pattern.permute.xlu0 0
      %1780 = vperm.xlu0 %1779, %v1488
      %v1781 = vpop.permute.xlu0 %1780
      %1784 = vset.pattern.permute.xlu0 0
      %1785 = vperm.xlu0 %1784, %v1489
      %v1786 = vpop.permute.xlu0 %1785
      %1789 = vset.pattern.permute.xlu0 0
      %1790 = vperm.xlu0 %1789, %v1490
      %v1791 = vpop.permute.xlu0 %1790
      %1794 = vset.pattern.permute.xlu0 0
      %1795 = vperm.xlu0 %1794, %v1491
      %v1796 = vpop.permute.xlu0 %1795
      %v1802 = vunpack.c.l.b16 %v1758
      %v1803 = vunpack.c.l.b16 %v1759
      %v1804 = vunpack.c.l.b16 %v1760
      %v1805 = vunpack.c.l.b16 %v1761
      %v1806 = vpack.c.b16 %v1803, %v1802
      %v1807 = vpack.c.b16 %v1805, %v1804
      %vm1808 = vcmask 523264
      %v1810 = vsel %vm1808, %v1806, 0
      %v1813 = vsel %vm1808, %v1807, 0
      %1815 = vmatprep.subr.bf16.mxu0 %v1763
      %1816 = vmatpush1.bf16.msra.mxu0 %v1762
      %1817 = vmatprep.subr.bf16.mxu0 %v1767
      %1818 = vmatpush1.bf16.msra.mxu0 %v1766
      %1819 = vmatprep.subr.bf16.mxu0 %v1771
      %1820 = vmatpush1.bf16.msra.mxu0 %v1770
      %1821 = vmatprep.subr.bf16.mxu0 %v1775
      %1822 = vmatpush1.bf16.msra.mxu0 %v1774
      %1823 = vmatprep.subr.bf16.mxu0 0
      %1824 = vmatpush1.bf16.msra.mxu0 0
      %1825 = vmatprep.subr.bf16.mxu0 0
      %1826 = vmatpush1.bf16.msra.mxu0 0
      %1827 = vmatprep.subr.bf16.mxu0 0
      %1828 = vmatpush1.bf16.msra.mxu0 0
      %1829 = vmatprep.subr.bf16.mxu0 0
      %1830 = vmatpush1.bf16.msra.mxu0 0
      %1831 = vmatprep.subr.bf16.mxu0 0
      %1832 = vmatpush1.bf16.msra.mxu0 0
      %1833 = vmatprep.subr.bf16.mxu0 0
      %1834 = vmatpush1.bf16.msra.mxu0 0
      %1835 = vmatprep.subr.bf16.mxu0 0
      %1836 = vmatpush1.bf16.msra.mxu0 0
      %1837 = vmatprep.subr.bf16.mxu0 0
      %1838 = vmatpush1.bf16.msra.mxu0 0
      %1839 = vmatprep.subr.bf16.mxu0 0
      %1840 = vmatpush1.bf16.msra.mxu0 0
      %1841 = vmatprep.subr.bf16.mxu0 0
      %1842 = vmatpush1.bf16.msra.mxu0 0
      %1843 = vmatprep.subr.bf16.mxu0 0
      %1844 = vmatpush1.bf16.msra.mxu0 0
      %1845 = vmatprep.subr.bf16.mxu0 0
      %1846 = vmatpush1.bf16.msra.mxu0 0
      %1847 = vmatprep.mubr.bf16.mxu0 0
      %1848 = vmatmul.mubr.bf16.gmra.mrb[0].mxu0 %v1810
      %v1849 = vpop.f32.mrb[0].mxu0
      %v1850 = vadd.f32 %v1781, %v1849
      %v1851 = vpop.f32.mrb[0].mxu0
      %v1852 = vadd.f32 %v1781, %v1851
      %v1853 = vpop.f32.mrb[0].mxu0
      %v1854 = vadd.f32 %v1786, %v1853
      %v1855 = vpop.f32.mrb[0].mxu0
      %v1856 = vadd.f32 %v1786, %v1855
      %1857 = vmatprep.mubr.bf16.mxu0 0
      %1858 = vmatmul.mubr.bf16.gmra.mrb[0].mxu0 %v1813
      %v1859 = vpop.f32.mrb[0].mxu0
      %v1860 = vadd.f32 %v1791, %v1859
      %v1861 = vpop.f32.mrb[0].mxu0
      %v1862 = vadd.f32 %v1791, %v1861
      %v1863 = vpop.f32.mrb[0].mxu0
      %v1864 = vadd.f32 %v1796, %v1863
      %v1865 = vpop.f32.mrb[0].mxu0
      %v1866 = vadd.f32 %v1796, %v1865
      %1867 = vdwg.mxu0
      %1868 = vmatprep.subr.bf16.mxu0 %v1765
      %1869 = vmatpush1.bf16.msra.mxu0 %v1764
      %1870 = vmatprep.subr.bf16.mxu0 %v1769
      %1871 = vmatpush1.bf16.msra.mxu0 %v1768
      %1872 = vmatprep.subr.bf16.mxu0 %v1773
      %1873 = vmatpush1.bf16.msra.mxu0 %v1772
      %1874 = vmatprep.subr.bf16.mxu0 %v1777
      %1875 = vmatpush1.bf16.msra.mxu0 %v1776
      %1876 = vmatprep.subr.bf16.mxu0 0
      %1877 = vmatpush1.bf16.msra.mxu0 0
      %1878 = vmatprep.subr.bf16.mxu0 0
      %1879 = vmatpush1.bf16.msra.mxu0 0
      %1880 = vmatprep.subr.bf16.mxu0 0
      %1881 = vmatpush1.bf16.msra.mxu0 0
      %1882 = vmatprep.subr.bf16.mxu0 0
      %1883 = vmatpush1.bf16.msra.mxu0 0
      %1884 = vmatprep.subr.bf16.mxu0 0
      %1885 = vmatpush1.bf16.msra.mxu0 0
      %1886 = vmatprep.subr.bf16.mxu0 0
      %1887 = vmatpush1.bf16.msra.mxu0 0
      %1888 = vmatprep.subr.bf16.mxu0 0
      %1889 = vmatpush1.bf16.msra.mxu0 0
      %1890 = vmatprep.subr.bf16.mxu0 0
      %1891 = vmatpush1.bf16.msra.mxu0 0
      %1892 = vmatprep.subr.bf16.mxu0 0
      %1893 = vmatpush1.bf16.msra.mxu0 0
      %1894 = vmatprep.subr.bf16.mxu0 0
      %1895 = vmatpush1.bf16.msra.mxu0 0
      %1896 = vmatprep.subr.bf16.mxu0 0
      %1897 = vmatpush1.bf16.msra.mxu0 0
      %1898 = vmatprep.subr.bf16.mxu0 0
      %1899 = vmatpush1.bf16.msra.mxu0 0
      %1900 = vmatprep.mubr.bf16.mxu0 0
      %1901 = vmatmul.mubr.bf16.gmra.mrb[0].mxu0 %v1810
      %v1902 = vpop.f32.mrb[0].mxu0
      %v1903 = vadd.f32 %v1781, %v1902
      %v1904 = vpop.f32.mrb[0].mxu0
      %v1905 = vadd.f32 %v1781, %v1904
      %v1906 = vpop.f32.mrb[0].mxu0
      %v1907 = vadd.f32 %v1786, %v1906
      %v1908 = vpop.f32.mrb[0].mxu0
      %v1909 = vadd.f32 %v1786, %v1908
      %1910 = vmatprep.mubr.bf16.mxu0 0
      %1911 = vmatmul.mubr.bf16.gmra.mrb[0].mxu0 %v1813
      %v1912 = vpop.f32.mrb[0].mxu0
      %v1913 = vadd.f32 %v1791, %v1912
      %v1914 = vpop.f32.mrb[0].mxu0
      %v1915 = vadd.f32 %v1791, %v1914
      %v1916 = vpop.f32.mrb[0].mxu0
      %v1917 = vadd.f32 %v1796, %v1916
      %v1918 = vpop.f32.mrb[0].mxu0
      %v1919 = vadd.f32 %v1796, %v1918
      %1920 = vdwg.mxu0
      %v1921 = vmax.f32 %v1850, 0.0
      %v1922 = vmax.f32 %v1852, 0.0
      %v1923 = vmax.f32 %v1903, 0.0
      %v1924 = vmax.f32 %v1905, 0.0
      %v1925 = vmax.f32 %v1854, 0.0
      %v1926 = vmax.f32 %v1856, 0.0
      %v1927 = vmax.f32 %v1907, 0.0
      %v1928 = vmax.f32 %v1909, 0.0
      %v1929 = vmax.f32 %v1860, 0.0
      %v1930 = vmax.f32 %v1862, 0.0
      %v1931 = vmax.f32 %v1913, 0.0
      %v1932 = vmax.f32 %v1915, 0.0
      %v1933 = vmax.f32 %v1864, 0.0
      %v1934 = vmax.f32 %v1866, 0.0
      %v1935 = vmax.f32 %v1917, 0.0
      %v1936 = vmax.f32 %v1919, 0.0
      %v1937 = vld [vmem:[%s8] sm:$0xff]
      %v1939 = vsel %vm806, %v1937, 0
      %1941 = vmatprep.subr.mxu0 %v1922
      %1942 = vmatpush1.msra.mxu0 %v1921
      %1943 = vmatprep.subr.mxu0 %v1926
      %1944 = vmatpush1.msra.mxu0 %v1925
      %1945 = vmatprep.subr.mxu0 %v1930
      %1946 = vmatpush1.msra.mxu0 %v1929
      %1947 = vmatprep.subr.mxu0 %v1934
      %1948 = vmatpush1.msra.mxu0 %v1933
      %1949 = vmatprep.subr.mxu0 0.0
      %1950 = vmatpush1.msra.mxu0 0.0
      %1951 = vmatprep.subr.mxu0 0.0
      %1952 = vmatpush1.msra.mxu0 0.0
      %1953 = vmatprep.subr.mxu0 0.0
      %1954 = vmatpush1.msra.mxu0 0.0
      %1955 = vmatprep.subr.mxu0 0.0
      %1956 = vmatpush1.msra.mxu0 0.0
      %1957 = vmatprep.subr.mxu0 0.0
      %1958 = vmatpush1.msra.mxu0 0.0
      %1959 = vmatprep.subr.mxu0 0.0
      %1960 = vmatpush1.msra.mxu0 0.0
      %1961 = vmatprep.subr.mxu0 0.0
      %1962 = vmatpush1.msra.mxu0 0.0
      %1963 = vmatprep.subr.mxu0 0.0
      %1964 = vmatpush1.msra.mxu0 0.0
      %1965 = vmatprep.subr.mxu0 0.0
      %1966 = vmatpush1.msra.mxu0 0.0
      %1967 = vmatprep.subr.mxu0 0.0
      %1968 = vmatpush1.msra.mxu0 0.0
      %1969 = vmatprep.subr.mxu0 0.0
      %1970 = vmatpush1.msra.mxu0 0.0
      %1971 = vmatprep.subr.mxu0 0.0
      %1972 = vmatpush1.msra.mxu0 0.0
      %1973 = vmatprep.subr.mxu0 0.0
      %1974 = vmatpush1.msra.mxu0 0.0
      %1975 = vmatprep.subr.mxu0 0.0
      %1976 = vmatpush1.msra.mxu0 0.0
      %1977 = vmatprep.subr.mxu0 0.0
      %1978 = vmatpush1.msra.mxu0 0.0
      %1979 = vmatprep.subr.mxu0 0.0
      %1980 = vmatpush1.msra.mxu0 0.0
      %1981 = vmatprep.subr.mxu0 0.0
      %1982 = vmatpush1.msra.mxu0 0.0
      %1983 = vmatprep.subr.mxu0 0.0
      %1984 = vmatpush1.msra.mxu0 0.0
      %1985 = vmatprep.subr.mxu0 0.0
      %1986 = vmatpush1.msra.mxu0 0.0
      %1987 = vmatprep.subr.mxu0 0.0
      %1988 = vmatpush1.msra.mxu0 0.0
      %1989 = vmatprep.subr.mxu0 0.0
      %1990 = vmatpush1.msra.mxu0 0.0
      %1991 = vmatprep.subr.mxu0 0.0
      %1992 = vmatpush1.msra.mxu0 0.0
      %1993 = vmatprep.subr.mxu0 0.0
      %1994 = vmatpush1.msra.mxu0 0.0
      %1995 = vmatprep.subr.mxu0 0.0
      %1996 = vmatpush1.msra.mxu0 0.0
      %1997 = vmatprep.subr.mxu0 0.0
      %1998 = vmatpush1.msra.mxu0 0.0
      %1999 = vmatprep.subr.mxu0 0.0
      %2000 = vmatpush1.msra.mxu0 0.0
      %2001 = vmatprep.subr.mxu0 0.0
      %2002 = vmatpush1.msra.mxu0 0.0
      %2003 = vmatprep.subr.mxu0 0.0
      %2004 = vmatpush1.msra.mxu0 0.0
      %2005 = vmatprep.mubr.f32.mxu0 0.0
      %2006 = vmatmul.mubr.f32.gmra.mrb[0].mxu0 %v1939
      %v2007 = vpop.f32.mrb[0].mxu0
      %v2008 = vadd.f32 0.0, %v2007
      %v2009 = vpop.f32.mrb[0].mxu0
      %v2010 = vadd.f32 0.0, %v2009
      %2011 = vdwg.mxu0
      %2012 = vmatprep.subr.mxu0 %v1924
      %2013 = vmatpush1.msra.mxu0 %v1923
      %2014 = vmatprep.subr.mxu0 %v1928
      %2015 = vmatpush1.msra.mxu0 %v1927
      %2016 = vmatprep.subr.mxu0 %v1932
      %2017 = vmatpush1.msra.mxu0 %v1931
      %2018 = vmatprep.subr.mxu0 %v1936
      %2019 = vmatpush1.msra.mxu0 %v1935
      %2020 = vmatprep.subr.mxu0 0.0
      %2021 = vmatpush1.msra.mxu0 0.0
      %2022 = vmatprep.subr.mxu0 0.0
      %2023 = vmatpush1.msra.mxu0 0.0
      %2024 = vmatprep.subr.mxu0 0.0
      %2025 = vmatpush1.msra.mxu0 0.0
      %2026 = vmatprep.subr.mxu0 0.0
      %2027 = vmatpush1.msra.mxu0 0.0
      %2028 = vmatprep.subr.mxu0 0.0
      %2029 = vmatpush1.msra.mxu0 0.0
      %2030 = vmatprep.subr.mxu0 0.0
      %2031 = vmatpush1.msra.mxu0 0.0
      %2032 = vmatprep.subr.mxu0 0.0
      %2033 = vmatpush1.msra.mxu0 0.0
      %2034 = vmatprep.subr.mxu0 0.0
      %2035 = vmatpush1.msra.mxu0 0.0
      %2036 = vmatprep.subr.mxu0 0.0
      %2037 = vmatpush1.msra.mxu0 0.0
      %2038 = vmatprep.subr.mxu0 0.0
      %2039 = vmatpush1.msra.mxu0 0.0
      %2040 = vmatprep.subr.mxu0 0.0
      %2041 = vmatpush1.msra.mxu0 0.0
      %2042 = vmatprep.subr.mxu0 0.0
      %2043 = vmatpush1.msra.mxu0 0.0
      %2044 = vmatprep.subr.mxu0 0.0
      %2045 = vmatpush1.msra.mxu0 0.0
      %2046 = vmatprep.subr.mxu0 0.0
      %2047 = vmatpush1.msra.mxu0 0.0
      %2048 = vmatprep.subr.mxu0 0.0
      %2049 = vmatpush1.msra.mxu0 0.0
      %2050 = vmatprep.subr.mxu0 0.0
      %2051 = vmatpush1.msra.mxu0 0.0
      %2052 = vmatprep.subr.mxu0 0.0
      %2053 = vmatpush1.msra.mxu0 0.0
      %2054 = vmatprep.subr.mxu0 0.0
      %2055 = vmatpush1.msra.mxu0 0.0
      %2056 = vmatprep.subr.mxu0 0.0
      %2057 = vmatpush1.msra.mxu0 0.0
      %2058 = vmatprep.subr.mxu0 0.0
      %2059 = vmatpush1.msra.mxu0 0.0
      %2060 = vmatprep.subr.mxu0 0.0
      %2061 = vmatpush1.msra.mxu0 0.0
      %2062 = vmatprep.subr.mxu0 0.0
      %2063 = vmatpush1.msra.mxu0 0.0
      %2064 = vmatprep.subr.mxu0 0.0
      %2065 = vmatpush1.msra.mxu0 0.0
      %2066 = vmatprep.subr.mxu0 0.0
      %2067 = vmatpush1.msra.mxu0 0.0
      %2068 = vmatprep.subr.mxu0 0.0
      %2069 = vmatpush1.msra.mxu0 0.0
      %2070 = vmatprep.subr.mxu0 0.0
      %2071 = vmatpush1.msra.mxu0 0.0
      %2072 = vmatprep.subr.mxu0 0.0
      %2073 = vmatpush1.msra.mxu0 0.0
      %2074 = vmatprep.subr.mxu0 0.0
      %2075 = vmatpush1.msra.mxu0 0.0
      %2076 = vmatprep.mubr.f32.mxu0 0.0
      %2077 = vmatmul.mubr.f32.gmra.mrb[0].mxu0 %v1939
      %v2078 = vpop.f32.mrb[0].mxu0
      %v2079 = vadd.f32 0.0, %v2078
      %v2080 = vpop.f32.mrb[0].mxu0
      %v2081 = vadd.f32 0.0, %v2080
      %2082 = vdwg.mxu0
      %v2087 = vcombine.low %v2008, %v2010
      %v2088 = vcombine.low %v2079, %v2081
      %v2090 = vunpack.c.l.s4 1966171168
      %v2091 = vunpack.c.0.s8 %v2090
      %v2092 = vlaneseq
      %v2093 = vshrl.u32 %v2092, 7
      %v2094 = vsub.s32 %v2091, %v2093
      %v2095 = vrot.slane %v2087, %v2094
      %v2097 = vunpack.c.l.s4 1966171168
      %v2098 = vunpack.c.0.s8 %v2097
      %v2099 = vlaneseq
      %v2100 = vshrl.u32 %v2099, 7
      %v2101 = vsub.s32 %v2098, %v2100
      %v2102 = vrot.slane %v2088, %v2101
      %v2103 = vcombine.low %v2095, %v2102
      %v2105 = vunpack.c.l.s4 1966171168
      %v2106 = vunpack.c.0.s8 %v2105
      %v2107 = vlaneseq
      %v2108 = vshrl.u32 %v2107, 7
      %v2109 = vsub.s32 %v2106, %v2108
      %v2110 = vrot.slane %v2103, %v2109
      %v2112 = vlaneseq
      %vm2113 = vcmp.ge.s32.totalorder %v2112, 0
      %vm2114 = vcmp.lt.s32.totalorder %v2112, 512
      %vm2115 = vmand %vm2113, %vm2114
      %2116 = vst.msk [vmem:[%s332] sm:$0xf] %vm2115, %v2110
      %s2117 = smul.u32 4, %s20
      %p2118 = scmp.lt.s32.totalorder %s2117, 7
      %s2119 = scalar_select %p2118, %s2117, 7
      %s2120 = scalar_lea.vmem %s9, %s2119
      // Predicated region
      $region57: #{deep_catboost_forward.1} parent=55 // pred_check
        %p2121 = pneg %p232
      $region58: #{deep_catboost_forward.1} parent=55 // pred_check_branch
        %2123 = sbr.rel (%p2121) target = $region60
      $region59: #{deep_catboost_forward.1} parent=55 // pred_region
        %s2124 = smul.u32 4, %s20
      $region60: #{deep_catboost_forward.1} parent=55 // pred_fallthru
        _
    $region56: #{deep_catboost_forward.1} parent=5 // pred_fallthru
      _
    %p2125 = scmp.le.s32.totalorder 2, %s15
    // Predicated region
    $region61: #{deep_catboost_forward.1} parent=5 // pred_check
      %p2126 = pneg %p2125
    $region62: #{deep_catboost_forward.1} parent=5 // pred_check_branch
      %2128 = sbr.rel (%p2126) target = $region64
    $region63: #{deep_catboost_forward.1} parent=5 // pred_region
      %s2129 = ssub.s32 %s15, 2
      // Predicated region
      $region65: #{deep_catboost_forward.1} parent=63 // pred_check
        %p2130 = pneg %p238
      $region66: #{deep_catboost_forward.1} parent=63 // pred_check_branch
        %2132 = sbr.rel (%p2130) target = $region68
      $region67: #{deep_catboost_forward.1} parent=63 // pred_region
        %s2133 = smul.u32 4, %s21
        %p2134 = scmp.lt.s32.totalorder %s2133, 7
        %s2135 = scalar_select %p2134, %s2133, 7
        %s2136 = scalar_lea.vmem %s9, %s2135
      $region68: #{deep_catboost_forward.1} parent=63 // pred_fallthru
        _
    $region64: #{deep_catboost_forward.1} parent=5 // pred_fallthru
      _
  $region6: #{deep_catboost_forward.1} parent=0 // loop_footer
    %s19 = sadd.s32 1, %s15
  $region7: #{deep_catboost_forward.1} parent=0 // loop_footer_branch
    %14 = sbr.rel target = $region3
  $region8: #{deep_catboost_forward.1} parent=0 // loop_exit
    _

</llo_original>
